<compile_context>
chip_gen: v7x
topology: tpu7x:2x2x1
jax: 0.10.0
libtpu: 0.0.40
codegen_flags: <defaults>
</compile_context>

<pallas_src>
import functools

import numpy as np
import jax
import jax.numpy as jnp
from jax.experimental import pallas as pl
from jax.experimental.pallas import tpu as pltpu


# --------------------------------------------------------------------------- #
# Hardware introspection (generation-aware budgets).
# --------------------------------------------------------------------------- #
@functools.lru_cache(maxsize=None)
def _tpu_vmem_capacity_bytes():
    try:
        cap = int(pltpu.get_tpu_info().vmem_capacity_bytes)
        if cap > 0:
            return cap
    except Exception:
        pass
    return 64 * 1024 * 1024            # conservative fallback (v7x per-TC VMEM)


@functools.lru_cache(maxsize=None)
def _supports_bf16_basis():
    """bf16 VALU/EUP exist on v6e / v7x; v5e (and unknown chips) stay f32."""
    try:
        kind = jax.devices()[0].device_kind.lower()
    except Exception:
        return False
    return any(tag in kind for tag in ("v6", "v7", "7x"))


def _vmem_limit_bytes():
    cap = _tpu_vmem_capacity_bytes()
    # ~48 MiB on v7x (64 MiB VMEM), ~96 MiB on v5e/v6e (128 MiB VMEM).
    return max(32 * 1024 * 1024, min((cap * 3) // 4, 112 * 1024 * 1024))


def _scaler_is_o_independent(scaler):
    """Trace-time check: is spline_scaler identical across out_features?"""
    try:
        s = np.asarray(scaler)                  # raises on traced values
    except Exception:
        return False
    if s.ndim != 2 or s.shape[0] == 0:
        return False
    return bool(np.all(s == s[:1, :]))


# --------------------------------------------------------------------------- #
# Shared per-layer math (runs inside the kernels).
# --------------------------------------------------------------------------- #
def _basis_from_distance(d, spline_order):
    if spline_order == 1:
        return jnp.maximum(jnp.zeros_like(d), 1.0 - d)
    if spline_order == 2:
        return jnp.exp(-0.5 * d * d)
    if spline_order == 3:
        return jnp.exp(-(d * d * d))
    return jnp.exp(-(d ** spline_order))        # static Python int order


def _kan_layer_general(x, w_gio, inv_scaler_io, bias_row, grid_ref, *,
                       spline_order, grid_size, compute_dtype):
    """o-dependent scaler path.

    x            : (TB, I)      f32
    w_gio        : (TO-lane)    (G, I, TO)  f32 or bf16
    inv_scaler_io: (I, TO)      f32
    bias_row     : (1, TO)      f32
    grid_ref     : SMEM (G,)    f32 scalars
    returns      : (TB, TO)     f32
    Working set is (TB, I, TO) so out_features sits on the 128-wide lane axis.
    """
    x = x.astype(jnp.float32)
    x_norm = jnp.tanh(x[:, :, None] * inv_scaler_io[None, :, :].astype(jnp.float32))
    x_norm = x_norm.astype(compute_dtype)                      # (TB, I, TO)

    numer = jnp.zeros(x_norm.shape, compute_dtype)
    denom = jnp.zeros(x_norm.shape, compute_dtype)
    for g in range(grid_size):                                  # static unroll (G small)
        gp = grid_ref[g]                                        # f32 scalar from SMEM
        if compute_dtype != jnp.float32:
            # Vector-side cast of the splatted scalar (avoids scalar bf16 ops).
            gp = jnp.full((1, 1, 1), gp, jnp.float32).astype(compute_dtype)
        d = jnp.abs(x_norm - gp)
        basis = _basis_from_distance(d, spline_order)
        denom = denom + basis
        numer = numer + w_gio[g].astype(compute_dtype)[None, :, :] * basis

    # Normalize after the g-reduction; approx reciprocal runs on the EUP slot.
    inv_den = pl.reciprocal(denom.astype(jnp.float32) + 1e-8, approx=True)
    out = jnp.sum(numer.astype(jnp.float32) * inv_den, axis=1)  # reduce over I
    return out + bias_row.astype(jnp.float32)


def _kan_layer_fast(x, w_gio, inv_scaler_row, bias_row, grid_ref, *,
                    spline_order, grid_size):
    """o-independent scaler path: basis once per (b, i); contraction on the MXU.

    x             : (TB, I)   f32
    w_gio         : (G, I, TO) f32
    inv_scaler_row: (1, I)    f32
    bias_row      : (1, TO)   f32
    returns       : (TB, TO)  f32
    """
    x = x.astype(jnp.float32)
    x_norm = jnp.tanh(x * inv_scaler_row.astype(jnp.float32))   # (TB, I)

    denom = jnp.zeros(x_norm.shape, jnp.float32)
    basis = []
    for g in range(grid_size):
        b_g = _basis_from_distance(jnp.abs(x_norm - grid_ref[g]), spline_order)
        denom = denom + b_g
        basis.append(b_g)
    inv_den = pl.reciprocal(denom + 1e-8, approx=True)           # (TB, I)

    acc = jnp.zeros((x.shape[0], w_gio.shape[-1]), jnp.float32)
    for g in range(grid_size):
        acc = acc + jnp.dot(basis[g] * inv_den,
                            w_gio[g].astype(jnp.float32),
                            preferred_element_type=jnp.float32)
    return acc + bias_row.astype(jnp.float32)


# --------------------------------------------------------------------------- #
# Per-layer tiled kernels (grid over (out_features, batch) tiles).
# --------------------------------------------------------------------------- #
def _kan_layer_general_kernel(grid_ref, x_ref, w_ref, invs_ref, bias_ref, out_ref,
                              *, spline_order, grid_size, compute_dtype):
    out_ref[...] = _kan_layer_general(
        x_ref[...], w_ref[...], invs_ref[...], bias_ref[...], grid_ref,
        spline_order=spline_order, grid_size=grid_size,
        compute_dtype=compute_dtype).astype(out_ref.dtype)


def _kan_layer_fast_kernel(grid_ref, x_ref, w_ref, invs_ref, bias_ref, out_ref,
                           *, spline_order, grid_size):
    out_ref[...] = _kan_layer_fast(
        x_ref[...], w_ref[...], invs_ref[...], bias_ref[...], grid_ref,
        spline_order=spline_order, grid_size=grid_size).astype(out_ref.dtype)


def _pick_tiles(batch, out_features, in_features, grid_size, *, fast):
    """Tile sizes: full extent at small shapes, (8,128)-aligned when tiled."""
    cap = _tpu_vmem_capacity_bytes()
    weight_budget = min(16 * 1024 * 1024, cap // 8)    # double-buffered (G,I,TO)
    interm_budget = min(8 * 1024 * 1024, cap // 12)    # live per-tile values

    # Out-feature tile -> lane axis of every big block: multiple of 128 when tiled.
    to_cap = weight_budget // (2 * 4 * grid_size * in_features)
    to_cap = max(128, (to_cap // 128) * 128)
    to = out_features if out_features <= to_cap else to_cap

    # Batch tile -> sublane-ish dim: multiple of 8 when tiled.
    if fast:
        per_row = 4 * (3 * to + (grid_size + 4) * in_features)
    else:
        per_row = 4 * 4 * in_features * to              # x_norm/numer/denom/basis
    tb_cap = max(8, ((interm_budget // max(per_row, 1)) // 8) * 8)
    tb = batch if batch <= tb_cap else tb_cap

    # v7x has two TensorCores: give a "parallel" axis >= 2 steps when shapes
    # allow (costs a single ~0.35 us extra grid step on single-core chips).
    if tb >= batch and to >= out_features:
        if batch >= 16:
            tb = max(8, (((batch + 1) // 2 + 7) // 8) * 8)
        elif out_features >= 256:
            to = max(128, ((out_features // 2) // 128) * 128)
    return tb, to


def _prep_layer_operands(weight, scaler, bias, grid_points, *, fast, compute_dtype):
    o, _, _ = weight.shape
    w_gio = jnp.transpose(weight.astype(jnp.float32), (2, 1, 0))   # (G, I, O)
    if (not fast) and compute_dtype == jnp.bfloat16:
        w_gio = w_gio.astype(jnp.bfloat16)        # halve weight DMA/vreg traffic
    inv_scaler = 1.0 / scaler.astype(jnp.float32)                  # hoisted recip
    if fast:
        invs = inv_scaler[0:1, :]                                  # (1, I)
    else:
        invs = jnp.transpose(inv_scaler, (1, 0))                   # (I, O)
    bias_row = bias.reshape(1, o).astype(jnp.float32)
    grid_pts = grid_points.astype(jnp.float32)
    return w_gio, invs, bias_row, grid_pts


def kan_layer_forward(x, weight, scaler, bias, grid_points, *, spline_order=3,
                      use_bf16_basis=None):
    """One KAN layer via a tiled Pallas kernel. x: (B, I) -> (B, O)."""
    B, I = x.shape
    O, _, G = weight.shape
    fast = _scaler_is_o_independent(scaler)
    if use_bf16_basis is None:
        use_bf16_basis = _supports_bf16_basis()
    compute_dtype = jnp.bfloat16 if (use_bf16_basis and not fast) else jnp.float32

    w_gio, invs, bias_row, grid_pts = _prep_layer_operands(
        weight, scaler, bias, grid_points, fast=fast, compute_dtype=compute_dtype)
    TB, TO = _pick_tiles(B, O, I, G, fast=fast)

    if fast:
        kernel = functools.partial(_kan_layer_fast_kernel,
                                   spline_order=spline_order, grid_size=G)
        invs_spec = pl.BlockSpec((1, I), lambda oi, bi: (0, 0))
    else:
        kernel = functools.partial(_kan_layer_general_kernel,
                                   spline_order=spline_order, grid_size=G,
                                   compute_dtype=compute_dtype)
        invs_spec = pl.BlockSpec((I, TO), lambda oi, bi: (0, oi))

    # Grid order (oi, bi): the large (G, I, TO) weight block only changes with
    # the outer step, so it stays VMEM-resident while the small x tile streams
    # along the inner batch axis (no repeated HBM weight reads per batch tile).
    return pl.pallas_call(
        kernel,
        out_shape=jax.ShapeDtypeStruct((B, O), jnp.float32),
        grid=(pl.cdiv(O, TO), pl.cdiv(B, TB)),
        in_specs=[
            pl.BlockSpec(memory_space=pltpu.MemorySpace.SMEM),        # grid_points
            pl.BlockSpec((TB, I), lambda oi, bi: (bi, 0)),            # x
            pl.BlockSpec((G, I, TO), lambda oi, bi: (0, 0, oi)),      # weight (G,I,O)
            invs_spec,                                                # 1/scaler
            pl.BlockSpec((1, TO), lambda oi, bi: (0, oi)),            # bias
        ],
        out_specs=pl.BlockSpec((TB, TO), lambda oi, bi: (bi, oi)),
        compiler_params=pltpu.CompilerParams(
            dimension_semantics=("parallel", "parallel"),
            vmem_limit_bytes=_vmem_limit_bytes(),
        ),
    )(grid_pts, x.astype(jnp.float32), w_gio, invs, bias_row)


# --------------------------------------------------------------------------- #
# Fused whole-network kernel (all layers in a single pallas_call) for networks
# whose parameters + largest live intermediate fit comfortably in VMEM.
# --------------------------------------------------------------------------- #
def _kan_network_kernel(*refs, num_layers, spline_order, grid_size, fast_flags,
                        compute_dtype):
    # refs = [grid_0..grid_{L-1}] (SMEM), x, (w_0, invs_0, b_0), ..., out_ref
    grids = refs[:num_layers]
    x_ref = refs[num_layers]
    layer_refs = refs[num_layers + 1:-1]
    out_ref = refs[-1]

    cur = x_ref[...].astype(jnp.float32)
    for li in range(num_layers):
        w = layer_refs[3 * li + 0][...]
        invs = layer_refs[3 * li + 1][...]
        bias = layer_refs[3 * li + 2][...]
        if fast_flags[li]:
            cur = _kan_layer_fast(cur, w, invs, bias, grids[li],
                                  spline_order=spline_order, grid_size=grid_size)
        else:
            cur = _kan_layer_general(cur, w, invs, bias, grids[li],
                                     spline_order=spline_order,
                                     grid_size=grid_size,
                                     compute_dtype=compute_dtype)
    out_ref[...] = cur.astype(out_ref.dtype)


def kan_network_forward_fused(x, params, *, spline_order=3, use_bf16_basis=None):
    B = x.shape[0]
    L = len(params)
    G = params[0]["grid_points"].shape[0]
    O_out = params[-1]["spline_weight"].shape[0]
    if use_bf16_basis is None:
        use_bf16_basis = _supports_bf16_basis()
    compute_dtype = jnp.bfloat16 if use_bf16_basis else jnp.float32

    fast_flags, grid_ops, layer_ops = [], [], []
    for p in params:
        fast = _scaler_is_o_independent(p["spline_scaler"])
        fast_flags.append(fast)
        w_gio, invs, bias_row, grid_pts = _prep_layer_operands(
            p["spline_weight"], p["spline_scaler"], p["bias"], p["grid_points"],
            fast=fast, compute_dtype=compute_dtype)
        grid_ops.append(grid_pts)
        layer_ops.append((w_gio, invs, bias_row))

    operands = list(grid_ops) + [x.astype(jnp.float32)]
    in_specs = [pl.BlockSpec(memory_space=pltpu.MemorySpace.SMEM)] * L
    in_specs.append(pl.BlockSpec(memory_space=pltpu.MemorySpace.VMEM))
    for ops in layer_ops:
        operands.extend(ops)
        in_specs.extend([pl.BlockSpec(memory_space=pltpu.MemorySpace.VMEM)] * 3)

    kernel = functools.partial(
        _kan_network_kernel, num_layers=L, spline_order=spline_order,
        grid_size=G, fast_flags=tuple(fast_flags), compute_dtype=compute_dtype)
    return pl.pallas_call(
        kernel,
        out_shape=jax.ShapeDtypeStruct((B, O_out), jnp.float32),
        in_specs=in_specs,
        out_specs=pl.BlockSpec(memory_space=pltpu.MemorySpace.VMEM),
        compiler_params=pltpu.CompilerParams(vmem_limit_bytes=_vmem_limit_bytes()),
    )(*operands)


def _fused_footprint_bytes(x, params, fast_flags):
    """Params + the largest single-layer live set (max over layers, not sum)."""
    b = x.shape[0]
    param_bytes, max_live, max_act = 0, 0, x.size * 4
    for p, fast in zip(params, fast_flags):
        o, i, g = p["spline_weight"].shape
        param_bytes += 4 * (o * i * g + o * i + o + g)
        if fast:
            live = 4 * ((g + 3) * b * i + 2 * b * o)
        else:
            live = 4 * 4 * b * i * o
        max_live = max(max_live, live)
        max_act = max(max_act, 4 * b * o)
    return param_bytes + max_live + 2 * max_act


def kan_network_forward(x, params, *, spline_order=3, fuse=None,
                        use_bf16_basis=None):
    """EnhancedKANNetwork.forward: sequential KAN layers."""
    if fuse is None:
        fast_flags = tuple(_scaler_is_o_independent(p["spline_scaler"])
                           for p in params)
        cap = _tpu_vmem_capacity_bytes()
        threshold = 24 * 1024 * 1024 if cap <= 64 * 1024 * 1024 else 32 * 1024 * 1024
        fuse = _fused_footprint_bytes(x, params, fast_flags) <= threshold
    if fuse:
        return kan_network_forward_fused(x, params, spline_order=spline_order,
                                         use_bf16_basis=use_bf16_basis)
    cur = x
    for p in params:
        cur = kan_layer_forward(cur, p["spline_weight"], p["spline_scaler"],
                                p["bias"], p["grid_points"],
                                spline_order=spline_order,
                                use_bf16_basis=use_bf16_basis)
    return cur


# --------------------------------------------------------------------------- #
# Parameter init + pure-JAX reference.
# --------------------------------------------------------------------------- #
def init_kan_network_params(key, input_dim, hidden_dims, output_dim, grid_size=8):
    """Deterministic parameter init mirroring EnhancedKANLayer.__init__."""
    layer_dims = [input_dim] + list(hidden_dims) + [output_dim]
    params = []
    for li in range(len(layer_dims) - 1):
        in_f, out_f = layer_dims[li], layer_dims[li + 1]
        key, wkey = jax.random.split(key)
        params.append({
            "spline_weight": jax.random.normal(wkey, (out_f, in_f, grid_size),
                                               dtype=jnp.float32),
            "spline_scaler": jnp.ones((out_f, in_f), dtype=jnp.float32),
            "bias": jnp.zeros((out_f,), dtype=jnp.float32),
            "grid_points": jnp.linspace(-2.0, 2.0, grid_size, dtype=jnp.float32),
        })
    return params


def _kan_layer_reference(x, weight, scaler, bias, grid_points, spline_order=3):
    """Pure-JAX reference (exact division) for correctness checks."""
    x_norm = jnp.tanh(x[:, None, :] / scaler[None, :, :])
    dist = jnp.abs(x_norm[..., None] - grid_points[None, None, None, :])
    if spline_order == 1:
        basis = jnp.maximum(jnp.zeros_like(dist), 1.0 - dist)
    elif spline_order == 2:
        basis = jnp.exp(-0.5 * dist * dist)
    else:
        basis = jnp.exp(-(dist ** spline_order))
    basis = basis / (jnp.sum(basis, axis=-1, keepdims=True) + 1e-8)
    return jnp.sum(weight[None] * basis, axis=(2, 3)) + bias[None, :]


def _kan_network_reference(x, params, spline_order=3):
    cur = x
    for p in params:
        cur = _kan_layer_reference(cur, p["spline_weight"], p["spline_scaler"],
                                   p["bias"], p["grid_points"], spline_order)
    return cur


if __name__ == "__main__":
    # Small shapes consistent with the module: batch=2, input_dim=8,
    # hidden_dims=[32, 16], output_dim=4, grid_size=8, spline_order=3.
    batch, input_dim, hidden_dims, output_dim = 2, 8, [32, 16], 4
    grid_size, spline_order = 8, 3

    key = jax.random.PRNGKey(0)
    key, xkey = jax.random.split(key)
    x = jax.random.normal(xkey, (batch, input_dim), dtype=jnp.float32)
    params = init_kan_network_params(key, input_dim, hidden_dims, output_dim,
                                     grid_size=grid_size)

    # --- default init (all-ones scaler -> MXU fast path), fused + tiled ------ #
    out_fused = jax.block_until_ready(
        kan_network_forward(x, params, spline_order=spline_order, fuse=True))
    out_tiled = jax.block_until_ready(
        kan_network_forward(x, params, spline_order=spline_order, fuse=False))
    ref = _kan_network_reference(x, params, spline_order)

    assert out_fused.shape == (batch, output_dim)
    assert out_tiled.shape == (batch, output_dim)
    # Loose tolerance: the kernel uses the approximate reciprocal (EUP) for the
    # basis normalization and the MXU for the contraction.
    assert jnp.allclose(out_fused, ref, atol=5e-2, rtol=5e-2), \
        "fused fast-path mismatch vs reference"
    assert jnp.allclose(out_tiled, ref, atol=5e-2, rtol=5e-2), \
        "tiled fast-path mismatch vs reference"
    assert jnp.allclose(out_fused, out_tiled, atol=1e-5, rtol=1e-5), \
        "fused vs tiled mismatch (fast path)"

    # --- non-uniform scaler -> general re-laned path (exact f32 basis) ------- #
    params_gen = []
    for p in params:
        key, skey = jax.random.split(key)
        q = dict(p)
        q["spline_scaler"] = 0.5 + jax.random.uniform(
            skey, p["spline_scaler"].shape, dtype=jnp.float32)
        params_gen.append(q)
    ref_gen = _kan_network_reference(x, params_gen, spline_order)

    out_gen_fused = jax.block_until_ready(
        kan_network_forward(x, params_gen, spline_order=spline_order,
                            fuse=True, use_bf16_basis=False))
    out_gen_tiled = jax.block_until_ready(
        kan_network_forward(x, params_gen, spline_order=spline_order,
                            fuse=False, use_bf16_basis=False))
    assert jnp.allclose(out_gen_fused, ref_gen, atol=3e-2, rtol=3e-2), \
        "fused general-path mismatch vs reference"
    assert jnp.allclose(out_gen_tiled, ref_gen, atol=3e-2, rtol=3e-2), \
        "tiled general-path mismatch vs reference"
    assert jnp.allclose(out_gen_fused, out_gen_tiled, atol=1e-5, rtol=1e-5), \
        "fused vs tiled mismatch (general path)"

    # --- auto configuration smoke run (bf16 basis on v6e/v7x, f32 on v5e) ---- #
    # bf16 trades accuracy for throughput (per review); only sanity-check it.
    out_auto = jax.block_until_ready(
        kan_network_forward(x, params_gen, spline_order=spline_order))
    assert out_auto.shape == ref_gen.shape
    assert bool(jnp.all(jnp.isfinite(out_auto))), "auto-config output not finite"

    print("KERNEL_OK")
</pallas_src>

<mosaic_0001>
module attributes {stable_mosaic.version = 11 : i64} {
  func.func @_kan_network_kernel(%arg0: memref<8xf32, #tpu.memory_space<smem>>, %arg1: memref<8xf32, #tpu.memory_space<smem>>, %arg2: memref<8xf32, #tpu.memory_space<smem>>, %arg3: memref<2x8xf32, #tpu.memory_space<vmem>>, %arg4: memref<8x8x32xf32, #tpu.memory_space<vmem>>, %arg5: memref<1x8xf32, #tpu.memory_space<vmem>>, %arg6: memref<1x32xf32, #tpu.memory_space<vmem>>, %arg7: memref<8x32x16xf32, #tpu.memory_space<vmem>>, %arg8: memref<1x32xf32, #tpu.memory_space<vmem>>, %arg9: memref<1x16xf32, #tpu.memory_space<vmem>>, %arg10: memref<8x16x4xf32, #tpu.memory_space<vmem>>, %arg11: memref<1x16xf32, #tpu.memory_space<vmem>>, %arg12: memref<1x4xf32, #tpu.memory_space<vmem>>, %arg13: memref<2x4xf32, #tpu.memory_space<vmem>>) attributes {dimension_semantics = [], scalar_prefetch = 0 : i64, scratch_operands = 0 : i64, tpu.core_type = #tpu.core_type<tc>} {
    %c0 = arith.constant 0 : index
    %c0_0 = arith.constant 0 : index
    %0 = vector.load %arg3[%c0, %c0_0] : memref<2x8xf32, #tpu.memory_space<vmem>>, vector<2x8xf32>
    %c0_1 = arith.constant 0 : index
    %c0_2 = arith.constant 0 : index
    %c0_3 = arith.constant 0 : index
    %1 = vector.load %arg4[%c0_1, %c0_2, %c0_3] : memref<8x8x32xf32, #tpu.memory_space<vmem>>, vector<8x8x32xf32>
    %c0_4 = arith.constant 0 : index
    %c0_5 = arith.constant 0 : index
    %2 = vector.load %arg5[%c0_4, %c0_5] : memref<1x8xf32, #tpu.memory_space<vmem>>, vector<1x8xf32>
    %c0_6 = arith.constant 0 : index
    %c0_7 = arith.constant 0 : index
    %3 = vector.load %arg6[%c0_6, %c0_7] : memref<1x32xf32, #tpu.memory_space<vmem>>, vector<1x32xf32>
    %4 = vector.broadcast %2 : vector<1x8xf32> to vector<2x8xf32>
    %5 = arith.mulf %0, %4 : vector<2x8xf32>
    %6 = math.tanh %5 : vector<2x8xf32>
    %cst = arith.constant 0.000000e+00 : f32
    %7 = vector.broadcast %cst : f32 to vector<2x8xf32>
    %c0_8 = arith.constant 0 : index
    %8 = memref.load %arg0[%c0_8] : memref<8xf32, #tpu.memory_space<smem>>
    %9 = vector.broadcast %8 : f32 to vector<2x8xf32>
    %10 = arith.subf %6, %9 : vector<2x8xf32>
    %11 = math.absf %10 : vector<2x8xf32>
    %12 = arith.mulf %11, %11 : vector<2x8xf32>
    %13 = arith.mulf %12, %11 : vector<2x8xf32>
    %cst_9 = arith.constant 0.000000e+00 : f32
    %14 = vector.broadcast %cst_9 : f32 to vector<2x8xf32>
    %15 = arith.subf %14, %13 : vector<2x8xf32>
    %16 = math.exp %15 : vector<2x8xf32>
    %17 = arith.addf %7, %16 : vector<2x8xf32>
    %c1 = arith.constant 1 : index
    %18 = memref.load %arg0[%c1] : memref<8xf32, #tpu.memory_space<smem>>
    %19 = vector.broadcast %18 : f32 to vector<2x8xf32>
    %20 = arith.subf %6, %19 : vector<2x8xf32>
    %21 = math.absf %20 : vector<2x8xf32>
    %22 = arith.mulf %21, %21 : vector<2x8xf32>
    %23 = arith.mulf %22, %21 : vector<2x8xf32>
    %cst_10 = arith.constant 0.000000e+00 : f32
    %24 = vector.broadcast %cst_10 : f32 to vector<2x8xf32>
    %25 = arith.subf %24, %23 : vector<2x8xf32>
    %26 = math.exp %25 : vector<2x8xf32>
    %27 = arith.addf %17, %26 : vector<2x8xf32>
    %c2 = arith.constant 2 : index
    %28 = memref.load %arg0[%c2] : memref<8xf32, #tpu.memory_space<smem>>
    %29 = vector.broadcast %28 : f32 to vector<2x8xf32>
    %30 = arith.subf %6, %29 : vector<2x8xf32>
    %31 = math.absf %30 : vector<2x8xf32>
    %32 = arith.mulf %31, %31 : vector<2x8xf32>
    %33 = arith.mulf %32, %31 : vector<2x8xf32>
    %cst_11 = arith.constant 0.000000e+00 : f32
    %34 = vector.broadcast %cst_11 : f32 to vector<2x8xf32>
    %35 = arith.subf %34, %33 : vector<2x8xf32>
    %36 = math.exp %35 : vector<2x8xf32>
    %37 = arith.addf %27, %36 : vector<2x8xf32>
    %c3 = arith.constant 3 : index
    %38 = memref.load %arg0[%c3] : memref<8xf32, #tpu.memory_space<smem>>
    %39 = vector.broadcast %38 : f32 to vector<2x8xf32>
    %40 = arith.subf %6, %39 : vector<2x8xf32>
    %41 = math.absf %40 : vector<2x8xf32>
    %42 = arith.mulf %41, %41 : vector<2x8xf32>
    %43 = arith.mulf %42, %41 : vector<2x8xf32>
    %cst_12 = arith.constant 0.000000e+00 : f32
    %44 = vector.broadcast %cst_12 : f32 to vector<2x8xf32>
    %45 = arith.subf %44, %43 : vector<2x8xf32>
    %46 = math.exp %45 : vector<2x8xf32>
    %47 = arith.addf %37, %46 : vector<2x8xf32>
    %c4 = arith.constant 4 : index
    %48 = memref.load %arg0[%c4] : memref<8xf32, #tpu.memory_space<smem>>
    %49 = vector.broadcast %48 : f32 to vector<2x8xf32>
    %50 = arith.subf %6, %49 : vector<2x8xf32>
    %51 = math.absf %50 : vector<2x8xf32>
    %52 = arith.mulf %51, %51 : vector<2x8xf32>
    %53 = arith.mulf %52, %51 : vector<2x8xf32>
    %cst_13 = arith.constant 0.000000e+00 : f32
    %54 = vector.broadcast %cst_13 : f32 to vector<2x8xf32>
    %55 = arith.subf %54, %53 : vector<2x8xf32>
    %56 = math.exp %55 : vector<2x8xf32>
    %57 = arith.addf %47, %56 : vector<2x8xf32>
    %c5 = arith.constant 5 : index
    %58 = memref.load %arg0[%c5] : memref<8xf32, #tpu.memory_space<smem>>
    %59 = vector.broadcast %58 : f32 to vector<2x8xf32>
    %60 = arith.subf %6, %59 : vector<2x8xf32>
    %61 = math.absf %60 : vector<2x8xf32>
    %62 = arith.mulf %61, %61 : vector<2x8xf32>
    %63 = arith.mulf %62, %61 : vector<2x8xf32>
    %cst_14 = arith.constant 0.000000e+00 : f32
    %64 = vector.broadcast %cst_14 : f32 to vector<2x8xf32>
    %65 = arith.subf %64, %63 : vector<2x8xf32>
    %66 = math.exp %65 : vector<2x8xf32>
    %67 = arith.addf %57, %66 : vector<2x8xf32>
    %c6 = arith.constant 6 : index
    %68 = memref.load %arg0[%c6] : memref<8xf32, #tpu.memory_space<smem>>
    %69 = vector.broadcast %68 : f32 to vector<2x8xf32>
    %70 = arith.subf %6, %69 : vector<2x8xf32>
    %71 = math.absf %70 : vector<2x8xf32>
    %72 = arith.mulf %71, %71 : vector<2x8xf32>
    %73 = arith.mulf %72, %71 : vector<2x8xf32>
    %cst_15 = arith.constant 0.000000e+00 : f32
    %74 = vector.broadcast %cst_15 : f32 to vector<2x8xf32>
    %75 = arith.subf %74, %73 : vector<2x8xf32>
    %76 = math.exp %75 : vector<2x8xf32>
    %77 = arith.addf %67, %76 : vector<2x8xf32>
    %c7 = arith.constant 7 : index
    %78 = memref.load %arg0[%c7] : memref<8xf32, #tpu.memory_space<smem>>
    %79 = vector.broadcast %78 : f32 to vector<2x8xf32>
    %80 = arith.subf %6, %79 : vector<2x8xf32>
    %81 = math.absf %80 : vector<2x8xf32>
    %82 = arith.mulf %81, %81 : vector<2x8xf32>
    %83 = arith.mulf %82, %81 : vector<2x8xf32>
    %cst_16 = arith.constant 0.000000e+00 : f32
    %84 = vector.broadcast %cst_16 : f32 to vector<2x8xf32>
    %85 = arith.subf %84, %83 : vector<2x8xf32>
    %86 = math.exp %85 : vector<2x8xf32>
    %87 = arith.addf %77, %86 : vector<2x8xf32>
    %cst_17 = arith.constant 9.99999993E-9 : f32
    %88 = vector.broadcast %cst_17 : f32 to vector<2x8xf32>
    %89 = arith.addf %87, %88 : vector<2x8xf32>
    %90 = tpu.reciprocal %89 {approx = true} : vector<2x8xf32> -> vector<2x8xf32>
    %cst_18 = arith.constant 0.000000e+00 : f32
    %91 = vector.broadcast %cst_18 : f32 to vector<2x32xf32>
    %92 = arith.mulf %16, %90 : vector<2x8xf32>
    %93 = vector.extract_strided_slice %1 {offsets = [0, 0, 0], sizes = [1, 8, 32], strides = [1, 1, 1]} : vector<8x8x32xf32> to vector<1x8x32xf32>
    %94 = vector.shape_cast %93 : vector<1x8x32xf32> to vector<8x32xf32>
    %cst_19 = arith.constant dense<0.000000e+00> : vector<2x32xf32>
    %95 = tpu.matmul %92, %94, %cst_19 {dimension_numbers = #tpu.dot_dimension_numbers<[1], [0], [0], [1], [0, 0, 1, 1], [], []>} : vector<2x8xf32>, vector<8x32xf32>, vector<2x32xf32> -> vector<2x32xf32>
    %96 = arith.addf %91, %95 : vector<2x32xf32>
    %97 = arith.mulf %26, %90 : vector<2x8xf32>
    %98 = vector.extract_strided_slice %1 {offsets = [1, 0, 0], sizes = [1, 8, 32], strides = [1, 1, 1]} : vector<8x8x32xf32> to vector<1x8x32xf32>
    %99 = vector.shape_cast %98 : vector<1x8x32xf32> to vector<8x32xf32>
    %cst_20 = arith.constant dense<0.000000e+00> : vector<2x32xf32>
    %100 = tpu.matmul %97, %99, %cst_20 {dimension_numbers = #tpu.dot_dimension_numbers<[1], [0], [0], [1], [0, 0, 1, 1], [], []>} : vector<2x8xf32>, vector<8x32xf32>, vector<2x32xf32> -> vector<2x32xf32>
    %101 = arith.addf %96, %100 : vector<2x32xf32>
    %102 = arith.mulf %36, %90 : vector<2x8xf32>
    %103 = vector.extract_strided_slice %1 {offsets = [2, 0, 0], sizes = [1, 8, 32], strides = [1, 1, 1]} : vector<8x8x32xf32> to vector<1x8x32xf32>
    %104 = vector.shape_cast %103 : vector<1x8x32xf32> to vector<8x32xf32>
    %cst_21 = arith.constant dense<0.000000e+00> : vector<2x32xf32>
    %105 = tpu.matmul %102, %104, %cst_21 {dimension_numbers = #tpu.dot_dimension_numbers<[1], [0], [0], [1], [0, 0, 1, 1], [], []>} : vector<2x8xf32>, vector<8x32xf32>, vector<2x32xf32> -> vector<2x32xf32>
    %106 = arith.addf %101, %105 : vector<2x32xf32>
    %107 = arith.mulf %46, %90 : vector<2x8xf32>
    %108 = vector.extract_strided_slice %1 {offsets = [3, 0, 0], sizes = [1, 8, 32], strides = [1, 1, 1]} : vector<8x8x32xf32> to vector<1x8x32xf32>
    %109 = vector.shape_cast %108 : vector<1x8x32xf32> to vector<8x32xf32>
    %cst_22 = arith.constant dense<0.000000e+00> : vector<2x32xf32>
    %110 = tpu.matmul %107, %109, %cst_22 {dimension_numbers = #tpu.dot_dimension_numbers<[1], [0], [0], [1], [0, 0, 1, 1], [], []>} : vector<2x8xf32>, vector<8x32xf32>, vector<2x32xf32> -> vector<2x32xf32>
    %111 = arith.addf %106, %110 : vector<2x32xf32>
    %112 = arith.mulf %56, %90 : vector<2x8xf32>
    %113 = vector.extract_strided_slice %1 {offsets = [4, 0, 0], sizes = [1, 8, 32], strides = [1, 1, 1]} : vector<8x8x32xf32> to vector<1x8x32xf32>
    %114 = vector.shape_cast %113 : vector<1x8x32xf32> to vector<8x32xf32>
    %cst_23 = arith.constant dense<0.000000e+00> : vector<2x32xf32>
    %115 = tpu.matmul %112, %114, %cst_23 {dimension_numbers = #tpu.dot_dimension_numbers<[1], [0], [0], [1], [0, 0, 1, 1], [], []>} : vector<2x8xf32>, vector<8x32xf32>, vector<2x32xf32> -> vector<2x32xf32>
    %116 = arith.addf %111, %115 : vector<2x32xf32>
    %117 = arith.mulf %66, %90 : vector<2x8xf32>
    %118 = vector.extract_strided_slice %1 {offsets = [5, 0, 0], sizes = [1, 8, 32], strides = [1, 1, 1]} : vector<8x8x32xf32> to vector<1x8x32xf32>
    %119 = vector.shape_cast %118 : vector<1x8x32xf32> to vector<8x32xf32>
    %cst_24 = arith.constant dense<0.000000e+00> : vector<2x32xf32>
    %120 = tpu.matmul %117, %119, %cst_24 {dimension_numbers = #tpu.dot_dimension_numbers<[1], [0], [0], [1], [0, 0, 1, 1], [], []>} : vector<2x8xf32>, vector<8x32xf32>, vector<2x32xf32> -> vector<2x32xf32>
    %121 = arith.addf %116, %120 : vector<2x32xf32>
    %122 = arith.mulf %76, %90 : vector<2x8xf32>
    %123 = vector.extract_strided_slice %1 {offsets = [6, 0, 0], sizes = [1, 8, 32], strides = [1, 1, 1]} : vector<8x8x32xf32> to vector<1x8x32xf32>
    %124 = vector.shape_cast %123 : vector<1x8x32xf32> to vector<8x32xf32>
    %cst_25 = arith.constant dense<0.000000e+00> : vector<2x32xf32>
    %125 = tpu.matmul %122, %124, %cst_25 {dimension_numbers = #tpu.dot_dimension_numbers<[1], [0], [0], [1], [0, 0, 1, 1], [], []>} : vector<2x8xf32>, vector<8x32xf32>, vector<2x32xf32> -> vector<2x32xf32>
    %126 = arith.addf %121, %125 : vector<2x32xf32>
    %127 = arith.mulf %86, %90 : vector<2x8xf32>
    %128 = vector.extract_strided_slice %1 {offsets = [7, 0, 0], sizes = [1, 8, 32], strides = [1, 1, 1]} : vector<8x8x32xf32> to vector<1x8x32xf32>
    %129 = vector.shape_cast %128 : vector<1x8x32xf32> to vector<8x32xf32>
    %cst_26 = arith.constant dense<0.000000e+00> : vector<2x32xf32>
    %130 = tpu.matmul %127, %129, %cst_26 {dimension_numbers = #tpu.dot_dimension_numbers<[1], [0], [0], [1], [0, 0, 1, 1], [], []>} : vector<2x8xf32>, vector<8x32xf32>, vector<2x32xf32> -> vector<2x32xf32>
    %131 = arith.addf %126, %130 : vector<2x32xf32>
    %132 = vector.broadcast %3 : vector<1x32xf32> to vector<2x32xf32>
    %133 = arith.addf %131, %132 : vector<2x32xf32>
    %c0_27 = arith.constant 0 : index
    %c0_28 = arith.constant 0 : index
    %c0_29 = arith.constant 0 : index
    %134 = vector.load %arg7[%c0_27, %c0_28, %c0_29] : memref<8x32x16xf32, #tpu.memory_space<vmem>>, vector<8x32x16xf32>
    %c0_30 = arith.constant 0 : index
    %c0_31 = arith.constant 0 : index
    %135 = vector.load %arg8[%c0_30, %c0_31] : memref<1x32xf32, #tpu.memory_space<vmem>>, vector<1x32xf32>
    %c0_32 = arith.constant 0 : index
    %c0_33 = arith.constant 0 : index
    %136 = vector.load %arg9[%c0_32, %c0_33] : memref<1x16xf32, #tpu.memory_space<vmem>>, vector<1x16xf32>
    %137 = vector.broadcast %135 : vector<1x32xf32> to vector<2x32xf32>
    %138 = arith.mulf %133, %137 : vector<2x32xf32>
    %139 = math.tanh %138 : vector<2x32xf32>
    %cst_34 = arith.constant 0.000000e+00 : f32
    %140 = vector.broadcast %cst_34 : f32 to vector<2x32xf32>
    %c0_35 = arith.constant 0 : index
    %141 = memref.load %arg1[%c0_35] : memref<8xf32, #tpu.memory_space<smem>>
    %142 = vector.broadcast %141 : f32 to vector<2x32xf32>
    %143 = arith.subf %139, %142 : vector<2x32xf32>
    %144 = math.absf %143 : vector<2x32xf32>
    %145 = arith.mulf %144, %144 : vector<2x32xf32>
    %146 = arith.mulf %145, %144 : vector<2x32xf32>
    %cst_36 = arith.constant 0.000000e+00 : f32
    %147 = vector.broadcast %cst_36 : f32 to vector<2x32xf32>
    %148 = arith.subf %147, %146 : vector<2x32xf32>
    %149 = math.exp %148 : vector<2x32xf32>
    %150 = arith.addf %140, %149 : vector<2x32xf32>
    %c1_37 = arith.constant 1 : index
    %151 = memref.load %arg1[%c1_37] : memref<8xf32, #tpu.memory_space<smem>>
    %152 = vector.broadcast %151 : f32 to vector<2x32xf32>
    %153 = arith.subf %139, %152 : vector<2x32xf32>
    %154 = math.absf %153 : vector<2x32xf32>
    %155 = arith.mulf %154, %154 : vector<2x32xf32>
    %156 = arith.mulf %155, %154 : vector<2x32xf32>
    %cst_38 = arith.constant 0.000000e+00 : f32
    %157 = vector.broadcast %cst_38 : f32 to vector<2x32xf32>
    %158 = arith.subf %157, %156 : vector<2x32xf32>
    %159 = math.exp %158 : vector<2x32xf32>
    %160 = arith.addf %150, %159 : vector<2x32xf32>
    %c2_39 = arith.constant 2 : index
    %161 = memref.load %arg1[%c2_39] : memref<8xf32, #tpu.memory_space<smem>>
    %162 = vector.broadcast %161 : f32 to vector<2x32xf32>
    %163 = arith.subf %139, %162 : vector<2x32xf32>
    %164 = math.absf %163 : vector<2x32xf32>
    %165 = arith.mulf %164, %164 : vector<2x32xf32>
    %166 = arith.mulf %165, %164 : vector<2x32xf32>
    %cst_40 = arith.constant 0.000000e+00 : f32
    %167 = vector.broadcast %cst_40 : f32 to vector<2x32xf32>
    %168 = arith.subf %167, %166 : vector<2x32xf32>
    %169 = math.exp %168 : vector<2x32xf32>
    %170 = arith.addf %160, %169 : vector<2x32xf32>
    %c3_41 = arith.constant 3 : index
    %171 = memref.load %arg1[%c3_41] : memref<8xf32, #tpu.memory_space<smem>>
    %172 = vector.broadcast %171 : f32 to vector<2x32xf32>
    %173 = arith.subf %139, %172 : vector<2x32xf32>
    %174 = math.absf %173 : vector<2x32xf32>
    %175 = arith.mulf %174, %174 : vector<2x32xf32>
    %176 = arith.mulf %175, %174 : vector<2x32xf32>
    %cst_42 = arith.constant 0.000000e+00 : f32
    %177 = vector.broadcast %cst_42 : f32 to vector<2x32xf32>
    %178 = arith.subf %177, %176 : vector<2x32xf32>
    %179 = math.exp %178 : vector<2x32xf32>
    %180 = arith.addf %170, %179 : vector<2x32xf32>
    %c4_43 = arith.constant 4 : index
    %181 = memref.load %arg1[%c4_43] : memref<8xf32, #tpu.memory_space<smem>>
    %182 = vector.broadcast %181 : f32 to vector<2x32xf32>
    %183 = arith.subf %139, %182 : vector<2x32xf32>
    %184 = math.absf %183 : vector<2x32xf32>
    %185 = arith.mulf %184, %184 : vector<2x32xf32>
    %186 = arith.mulf %185, %184 : vector<2x32xf32>
    %cst_44 = arith.constant 0.000000e+00 : f32
    %187 = vector.broadcast %cst_44 : f32 to vector<2x32xf32>
    %188 = arith.subf %187, %186 : vector<2x32xf32>
    %189 = math.exp %188 : vector<2x32xf32>
    %190 = arith.addf %180, %189 : vector<2x32xf32>
    %c5_45 = arith.constant 5 : index
    %191 = memref.load %arg1[%c5_45] : memref<8xf32, #tpu.memory_space<smem>>
    %192 = vector.broadcast %191 : f32 to vector<2x32xf32>
    %193 = arith.subf %139, %192 : vector<2x32xf32>
    %194 = math.absf %193 : vector<2x32xf32>
    %195 = arith.mulf %194, %194 : vector<2x32xf32>
    %196 = arith.mulf %195, %194 : vector<2x32xf32>
    %cst_46 = arith.constant 0.000000e+00 : f32
    %197 = vector.broadcast %cst_46 : f32 to vector<2x32xf32>
    %198 = arith.subf %197, %196 : vector<2x32xf32>
    %199 = math.exp %198 : vector<2x32xf32>
    %200 = arith.addf %190, %199 : vector<2x32xf32>
    %c6_47 = arith.constant 6 : index
    %201 = memref.load %arg1[%c6_47] : memref<8xf32, #tpu.memory_space<smem>>
    %202 = vector.broadcast %201 : f32 to vector<2x32xf32>
    %203 = arith.subf %139, %202 : vector<2x32xf32>
    %204 = math.absf %203 : vector<2x32xf32>
    %205 = arith.mulf %204, %204 : vector<2x32xf32>
    %206 = arith.mulf %205, %204 : vector<2x32xf32>
    %cst_48 = arith.constant 0.000000e+00 : f32
    %207 = vector.broadcast %cst_48 : f32 to vector<2x32xf32>
    %208 = arith.subf %207, %206 : vector<2x32xf32>
    %209 = math.exp %208 : vector<2x32xf32>
    %210 = arith.addf %200, %209 : vector<2x32xf32>
    %c7_49 = arith.constant 7 : index
    %211 = memref.load %arg1[%c7_49] : memref<8xf32, #tpu.memory_space<smem>>
    %212 = vector.broadcast %211 : f32 to vector<2x32xf32>
    %213 = arith.subf %139, %212 : vector<2x32xf32>
    %214 = math.absf %213 : vector<2x32xf32>
    %215 = arith.mulf %214, %214 : vector<2x32xf32>
    %216 = arith.mulf %215, %214 : vector<2x32xf32>
    %cst_50 = arith.constant 0.000000e+00 : f32
    %217 = vector.broadcast %cst_50 : f32 to vector<2x32xf32>
    %218 = arith.subf %217, %216 : vector<2x32xf32>
    %219 = math.exp %218 : vector<2x32xf32>
    %220 = arith.addf %210, %219 : vector<2x32xf32>
    %cst_51 = arith.constant 9.99999993E-9 : f32
    %221 = vector.broadcast %cst_51 : f32 to vector<2x32xf32>
    %222 = arith.addf %220, %221 : vector<2x32xf32>
    %223 = tpu.reciprocal %222 {approx = true} : vector<2x32xf32> -> vector<2x32xf32>
    %cst_52 = arith.constant 0.000000e+00 : f32
    %224 = vector.broadcast %cst_52 : f32 to vector<2x16xf32>
    %225 = arith.mulf %149, %223 : vector<2x32xf32>
    %226 = vector.extract_strided_slice %134 {offsets = [0, 0, 0], sizes = [1, 32, 16], strides = [1, 1, 1]} : vector<8x32x16xf32> to vector<1x32x16xf32>
    %227 = vector.shape_cast %226 : vector<1x32x16xf32> to vector<32x16xf32>
    %cst_53 = arith.constant dense<0.000000e+00> : vector<2x16xf32>
    %228 = tpu.matmul %225, %227, %cst_53 {dimension_numbers = #tpu.dot_dimension_numbers<[1], [0], [0], [1], [0, 0, 1, 1], [], []>} : vector<2x32xf32>, vector<32x16xf32>, vector<2x16xf32> -> vector<2x16xf32>
    %229 = arith.addf %224, %228 : vector<2x16xf32>
    %230 = arith.mulf %159, %223 : vector<2x32xf32>
    %231 = vector.extract_strided_slice %134 {offsets = [1, 0, 0], sizes = [1, 32, 16], strides = [1, 1, 1]} : vector<8x32x16xf32> to vector<1x32x16xf32>
    %232 = vector.shape_cast %231 : vector<1x32x16xf32> to vector<32x16xf32>
    %cst_54 = arith.constant dense<0.000000e+00> : vector<2x16xf32>
    %233 = tpu.matmul %230, %232, %cst_54 {dimension_numbers = #tpu.dot_dimension_numbers<[1], [0], [0], [1], [0, 0, 1, 1], [], []>} : vector<2x32xf32>, vector<32x16xf32>, vector<2x16xf32> -> vector<2x16xf32>
    %234 = arith.addf %229, %233 : vector<2x16xf32>
    %235 = arith.mulf %169, %223 : vector<2x32xf32>
    %236 = vector.extract_strided_slice %134 {offsets = [2, 0, 0], sizes = [1, 32, 16], strides = [1, 1, 1]} : vector<8x32x16xf32> to vector<1x32x16xf32>
    %237 = vector.shape_cast %236 : vector<1x32x16xf32> to vector<32x16xf32>
    %cst_55 = arith.constant dense<0.000000e+00> : vector<2x16xf32>
    %238 = tpu.matmul %235, %237, %cst_55 {dimension_numbers = #tpu.dot_dimension_numbers<[1], [0], [0], [1], [0, 0, 1, 1], [], []>} : vector<2x32xf32>, vector<32x16xf32>, vector<2x16xf32> -> vector<2x16xf32>
    %239 = arith.addf %234, %238 : vector<2x16xf32>
    %240 = arith.mulf %179, %223 : vector<2x32xf32>
    %241 = vector.extract_strided_slice %134 {offsets = [3, 0, 0], sizes = [1, 32, 16], strides = [1, 1, 1]} : vector<8x32x16xf32> to vector<1x32x16xf32>
    %242 = vector.shape_cast %241 : vector<1x32x16xf32> to vector<32x16xf32>
    %cst_56 = arith.constant dense<0.000000e+00> : vector<2x16xf32>
    %243 = tpu.matmul %240, %242, %cst_56 {dimension_numbers = #tpu.dot_dimension_numbers<[1], [0], [0], [1], [0, 0, 1, 1], [], []>} : vector<2x32xf32>, vector<32x16xf32>, vector<2x16xf32> -> vector<2x16xf32>
    %244 = arith.addf %239, %243 : vector<2x16xf32>
    %245 = arith.mulf %189, %223 : vector<2x32xf32>
    %246 = vector.extract_strided_slice %134 {offsets = [4, 0, 0], sizes = [1, 32, 16], strides = [1, 1, 1]} : vector<8x32x16xf32> to vector<1x32x16xf32>
    %247 = vector.shape_cast %246 : vector<1x32x16xf32> to vector<32x16xf32>
    %cst_57 = arith.constant dense<0.000000e+00> : vector<2x16xf32>
    %248 = tpu.matmul %245, %247, %cst_57 {dimension_numbers = #tpu.dot_dimension_numbers<[1], [0], [0], [1], [0, 0, 1, 1], [], []>} : vector<2x32xf32>, vector<32x16xf32>, vector<2x16xf32> -> vector<2x16xf32>
    %249 = arith.addf %244, %248 : vector<2x16xf32>
    %250 = arith.mulf %199, %223 : vector<2x32xf32>
    %251 = vector.extract_strided_slice %134 {offsets = [5, 0, 0], sizes = [1, 32, 16], strides = [1, 1, 1]} : vector<8x32x16xf32> to vector<1x32x16xf32>
    %252 = vector.shape_cast %251 : vector<1x32x16xf32> to vector<32x16xf32>
    %cst_58 = arith.constant dense<0.000000e+00> : vector<2x16xf32>
    %253 = tpu.matmul %250, %252, %cst_58 {dimension_numbers = #tpu.dot_dimension_numbers<[1], [0], [0], [1], [0, 0, 1, 1], [], []>} : vector<2x32xf32>, vector<32x16xf32>, vector<2x16xf32> -> vector<2x16xf32>
    %254 = arith.addf %249, %253 : vector<2x16xf32>
    %255 = arith.mulf %209, %223 : vector<2x32xf32>
    %256 = vector.extract_strided_slice %134 {offsets = [6, 0, 0], sizes = [1, 32, 16], strides = [1, 1, 1]} : vector<8x32x16xf32> to vector<1x32x16xf32>
    %257 = vector.shape_cast %256 : vector<1x32x16xf32> to vector<32x16xf32>
    %cst_59 = arith.constant dense<0.000000e+00> : vector<2x16xf32>
    %258 = tpu.matmul %255, %257, %cst_59 {dimension_numbers = #tpu.dot_dimension_numbers<[1], [0], [0], [1], [0, 0, 1, 1], [], []>} : vector<2x32xf32>, vector<32x16xf32>, vector<2x16xf32> -> vector<2x16xf32>
    %259 = arith.addf %254, %258 : vector<2x16xf32>
    %260 = arith.mulf %219, %223 : vector<2x32xf32>
    %261 = vector.extract_strided_slice %134 {offsets = [7, 0, 0], sizes = [1, 32, 16], strides = [1, 1, 1]} : vector<8x32x16xf32> to vector<1x32x16xf32>
    %262 = vector.shape_cast %261 : vector<1x32x16xf32> to vector<32x16xf32>
    %cst_60 = arith.constant dense<0.000000e+00> : vector<2x16xf32>
    %263 = tpu.matmul %260, %262, %cst_60 {dimension_numbers = #tpu.dot_dimension_numbers<[1], [0], [0], [1], [0, 0, 1, 1], [], []>} : vector<2x32xf32>, vector<32x16xf32>, vector<2x16xf32> -> vector<2x16xf32>
    %264 = arith.addf %259, %263 : vector<2x16xf32>
    %265 = vector.broadcast %136 : vector<1x16xf32> to vector<2x16xf32>
    %266 = arith.addf %264, %265 : vector<2x16xf32>
    %c0_61 = arith.constant 0 : index
    %c0_62 = arith.constant 0 : index
    %c0_63 = arith.constant 0 : index
    %267 = vector.load %arg10[%c0_61, %c0_62, %c0_63] : memref<8x16x4xf32, #tpu.memory_space<vmem>>, vector<8x16x4xf32>
    %c0_64 = arith.constant 0 : index
    %c0_65 = arith.constant 0 : index
    %268 = vector.load %arg11[%c0_64, %c0_65] : memref<1x16xf32, #tpu.memory_space<vmem>>, vector<1x16xf32>
    %c0_66 = arith.constant 0 : index
    %c0_67 = arith.constant 0 : index
    %269 = vector.load %arg12[%c0_66, %c0_67] : memref<1x4xf32, #tpu.memory_space<vmem>>, vector<1x4xf32>
    %270 = vector.broadcast %268 : vector<1x16xf32> to vector<2x16xf32>
    %271 = arith.mulf %266, %270 : vector<2x16xf32>
    %272 = math.tanh %271 : vector<2x16xf32>
    %cst_68 = arith.constant 0.000000e+00 : f32
    %273 = vector.broadcast %cst_68 : f32 to vector<2x16xf32>
    %c0_69 = arith.constant 0 : index
    %274 = memref.load %arg2[%c0_69] : memref<8xf32, #tpu.memory_space<smem>>
    %275 = vector.broadcast %274 : f32 to vector<2x16xf32>
    %276 = arith.subf %272, %275 : vector<2x16xf32>
    %277 = math.absf %276 : vector<2x16xf32>
    %278 = arith.mulf %277, %277 : vector<2x16xf32>
    %279 = arith.mulf %278, %277 : vector<2x16xf32>
    %cst_70 = arith.constant 0.000000e+00 : f32
    %280 = vector.broadcast %cst_70 : f32 to vector<2x16xf32>
    %281 = arith.subf %280, %279 : vector<2x16xf32>
    %282 = math.exp %281 : vector<2x16xf32>
    %283 = arith.addf %273, %282 : vector<2x16xf32>
    %c1_71 = arith.constant 1 : index
    %284 = memref.load %arg2[%c1_71] : memref<8xf32, #tpu.memory_space<smem>>
    %285 = vector.broadcast %284 : f32 to vector<2x16xf32>
    %286 = arith.subf %272, %285 : vector<2x16xf32>
    %287 = math.absf %286 : vector<2x16xf32>
    %288 = arith.mulf %287, %287 : vector<2x16xf32>
    %289 = arith.mulf %288, %287 : vector<2x16xf32>
    %cst_72 = arith.constant 0.000000e+00 : f32
    %290 = vector.broadcast %cst_72 : f32 to vector<2x16xf32>
    %291 = arith.subf %290, %289 : vector<2x16xf32>
    %292 = math.exp %291 : vector<2x16xf32>
    %293 = arith.addf %283, %292 : vector<2x16xf32>
    %c2_73 = arith.constant 2 : index
    %294 = memref.load %arg2[%c2_73] : memref<8xf32, #tpu.memory_space<smem>>
    %295 = vector.broadcast %294 : f32 to vector<2x16xf32>
    %296 = arith.subf %272, %295 : vector<2x16xf32>
    %297 = math.absf %296 : vector<2x16xf32>
    %298 = arith.mulf %297, %297 : vector<2x16xf32>
    %299 = arith.mulf %298, %297 : vector<2x16xf32>
    %cst_74 = arith.constant 0.000000e+00 : f32
    %300 = vector.broadcast %cst_74 : f32 to vector<2x16xf32>
    %301 = arith.subf %300, %299 : vector<2x16xf32>
    %302 = math.exp %301 : vector<2x16xf32>
    %303 = arith.addf %293, %302 : vector<2x16xf32>
    %c3_75 = arith.constant 3 : index
    %304 = memref.load %arg2[%c3_75] : memref<8xf32, #tpu.memory_space<smem>>
    %305 = vector.broadcast %304 : f32 to vector<2x16xf32>
    %306 = arith.subf %272, %305 : vector<2x16xf32>
    %307 = math.absf %306 : vector<2x16xf32>
    %308 = arith.mulf %307, %307 : vector<2x16xf32>
    %309 = arith.mulf %308, %307 : vector<2x16xf32>
    %cst_76 = arith.constant 0.000000e+00 : f32
    %310 = vector.broadcast %cst_76 : f32 to vector<2x16xf32>
    %311 = arith.subf %310, %309 : vector<2x16xf32>
    %312 = math.exp %311 : vector<2x16xf32>
    %313 = arith.addf %303, %312 : vector<2x16xf32>
    %c4_77 = arith.constant 4 : index
    %314 = memref.load %arg2[%c4_77] : memref<8xf32, #tpu.memory_space<smem>>
    %315 = vector.broadcast %314 : f32 to vector<2x16xf32>
    %316 = arith.subf %272, %315 : vector<2x16xf32>
    %317 = math.absf %316 : vector<2x16xf32>
    %318 = arith.mulf %317, %317 : vector<2x16xf32>
    %319 = arith.mulf %318, %317 : vector<2x16xf32>
    %cst_78 = arith.constant 0.000000e+00 : f32
    %320 = vector.broadcast %cst_78 : f32 to vector<2x16xf32>
    %321 = arith.subf %320, %319 : vector<2x16xf32>
    %322 = math.exp %321 : vector<2x16xf32>
    %323 = arith.addf %313, %322 : vector<2x16xf32>
    %c5_79 = arith.constant 5 : index
    %324 = memref.load %arg2[%c5_79] : memref<8xf32, #tpu.memory_space<smem>>
    %325 = vector.broadcast %324 : f32 to vector<2x16xf32>
    %326 = arith.subf %272, %325 : vector<2x16xf32>
    %327 = math.absf %326 : vector<2x16xf32>
    %328 = arith.mulf %327, %327 : vector<2x16xf32>
    %329 = arith.mulf %328, %327 : vector<2x16xf32>
    %cst_80 = arith.constant 0.000000e+00 : f32
    %330 = vector.broadcast %cst_80 : f32 to vector<2x16xf32>
    %331 = arith.subf %330, %329 : vector<2x16xf32>
    %332 = math.exp %331 : vector<2x16xf32>
    %333 = arith.addf %323, %332 : vector<2x16xf32>
    %c6_81 = arith.constant 6 : index
    %334 = memref.load %arg2[%c6_81] : memref<8xf32, #tpu.memory_space<smem>>
    %335 = vector.broadcast %334 : f32 to vector<2x16xf32>
    %336 = arith.subf %272, %335 : vector<2x16xf32>
    %337 = math.absf %336 : vector<2x16xf32>
    %338 = arith.mulf %337, %337 : vector<2x16xf32>
    %339 = arith.mulf %338, %337 : vector<2x16xf32>
    %cst_82 = arith.constant 0.000000e+00 : f32
    %340 = vector.broadcast %cst_82 : f32 to vector<2x16xf32>
    %341 = arith.subf %340, %339 : vector<2x16xf32>
    %342 = math.exp %341 : vector<2x16xf32>
    %343 = arith.addf %333, %342 : vector<2x16xf32>
    %c7_83 = arith.constant 7 : index
    %344 = memref.load %arg2[%c7_83] : memref<8xf32, #tpu.memory_space<smem>>
    %345 = vector.broadcast %344 : f32 to vector<2x16xf32>
    %346 = arith.subf %272, %345 : vector<2x16xf32>
    %347 = math.absf %346 : vector<2x16xf32>
    %348 = arith.mulf %347, %347 : vector<2x16xf32>
    %349 = arith.mulf %348, %347 : vector<2x16xf32>
    %cst_84 = arith.constant 0.000000e+00 : f32
    %350 = vector.broadcast %cst_84 : f32 to vector<2x16xf32>
    %351 = arith.subf %350, %349 : vector<2x16xf32>
    %352 = math.exp %351 : vector<2x16xf32>
    %353 = arith.addf %343, %352 : vector<2x16xf32>
    %cst_85 = arith.constant 9.99999993E-9 : f32
    %354 = vector.broadcast %cst_85 : f32 to vector<2x16xf32>
    %355 = arith.addf %353, %354 : vector<2x16xf32>
    %356 = tpu.reciprocal %355 {approx = true} : vector<2x16xf32> -> vector<2x16xf32>
    %cst_86 = arith.constant 0.000000e+00 : f32
    %357 = vector.broadcast %cst_86 : f32 to vector<2x4xf32>
    %358 = arith.mulf %282, %356 : vector<2x16xf32>
    %359 = vector.extract_strided_slice %267 {offsets = [0, 0, 0], sizes = [1, 16, 4], strides = [1, 1, 1]} : vector<8x16x4xf32> to vector<1x16x4xf32>
    %360 = vector.shape_cast %359 : vector<1x16x4xf32> to vector<16x4xf32>
    %cst_87 = arith.constant dense<0.000000e+00> : vector<2x4xf32>
    %361 = tpu.matmul %358, %360, %cst_87 {dimension_numbers = #tpu.dot_dimension_numbers<[1], [0], [0], [1], [0, 0, 1, 1], [], []>} : vector<2x16xf32>, vector<16x4xf32>, vector<2x4xf32> -> vector<2x4xf32>
    %362 = arith.addf %357, %361 : vector<2x4xf32>
    %363 = arith.mulf %292, %356 : vector<2x16xf32>
    %364 = vector.extract_strided_slice %267 {offsets = [1, 0, 0], sizes = [1, 16, 4], strides = [1, 1, 1]} : vector<8x16x4xf32> to vector<1x16x4xf32>
    %365 = vector.shape_cast %364 : vector<1x16x4xf32> to vector<16x4xf32>
    %cst_88 = arith.constant dense<0.000000e+00> : vector<2x4xf32>
    %366 = tpu.matmul %363, %365, %cst_88 {dimension_numbers = #tpu.dot_dimension_numbers<[1], [0], [0], [1], [0, 0, 1, 1], [], []>} : vector<2x16xf32>, vector<16x4xf32>, vector<2x4xf32> -> vector<2x4xf32>
    %367 = arith.addf %362, %366 : vector<2x4xf32>
    %368 = arith.mulf %302, %356 : vector<2x16xf32>
    %369 = vector.extract_strided_slice %267 {offsets = [2, 0, 0], sizes = [1, 16, 4], strides = [1, 1, 1]} : vector<8x16x4xf32> to vector<1x16x4xf32>
    %370 = vector.shape_cast %369 : vector<1x16x4xf32> to vector<16x4xf32>
    %cst_89 = arith.constant dense<0.000000e+00> : vector<2x4xf32>
    %371 = tpu.matmul %368, %370, %cst_89 {dimension_numbers = #tpu.dot_dimension_numbers<[1], [0], [0], [1], [0, 0, 1, 1], [], []>} : vector<2x16xf32>, vector<16x4xf32>, vector<2x4xf32> -> vector<2x4xf32>
    %372 = arith.addf %367, %371 : vector<2x4xf32>
    %373 = arith.mulf %312, %356 : vector<2x16xf32>
    %374 = vector.extract_strided_slice %267 {offsets = [3, 0, 0], sizes = [1, 16, 4], strides = [1, 1, 1]} : vector<8x16x4xf32> to vector<1x16x4xf32>
    %375 = vector.shape_cast %374 : vector<1x16x4xf32> to vector<16x4xf32>
    %cst_90 = arith.constant dense<0.000000e+00> : vector<2x4xf32>
    %376 = tpu.matmul %373, %375, %cst_90 {dimension_numbers = #tpu.dot_dimension_numbers<[1], [0], [0], [1], [0, 0, 1, 1], [], []>} : vector<2x16xf32>, vector<16x4xf32>, vector<2x4xf32> -> vector<2x4xf32>
    %377 = arith.addf %372, %376 : vector<2x4xf32>
    %378 = arith.mulf %322, %356 : vector<2x16xf32>
    %379 = vector.extract_strided_slice %267 {offsets = [4, 0, 0], sizes = [1, 16, 4], strides = [1, 1, 1]} : vector<8x16x4xf32> to vector<1x16x4xf32>
    %380 = vector.shape_cast %379 : vector<1x16x4xf32> to vector<16x4xf32>
    %cst_91 = arith.constant dense<0.000000e+00> : vector<2x4xf32>
    %381 = tpu.matmul %378, %380, %cst_91 {dimension_numbers = #tpu.dot_dimension_numbers<[1], [0], [0], [1], [0, 0, 1, 1], [], []>} : vector<2x16xf32>, vector<16x4xf32>, vector<2x4xf32> -> vector<2x4xf32>
    %382 = arith.addf %377, %381 : vector<2x4xf32>
    %383 = arith.mulf %332, %356 : vector<2x16xf32>
    %384 = vector.extract_strided_slice %267 {offsets = [5, 0, 0], sizes = [1, 16, 4], strides = [1, 1, 1]} : vector<8x16x4xf32> to vector<1x16x4xf32>
    %385 = vector.shape_cast %384 : vector<1x16x4xf32> to vector<16x4xf32>
    %cst_92 = arith.constant dense<0.000000e+00> : vector<2x4xf32>
    %386 = tpu.matmul %383, %385, %cst_92 {dimension_numbers = #tpu.dot_dimension_numbers<[1], [0], [0], [1], [0, 0, 1, 1], [], []>} : vector<2x16xf32>, vector<16x4xf32>, vector<2x4xf32> -> vector<2x4xf32>
    %387 = arith.addf %382, %386 : vector<2x4xf32>
    %388 = arith.mulf %342, %356 : vector<2x16xf32>
    %389 = vector.extract_strided_slice %267 {offsets = [6, 0, 0], sizes = [1, 16, 4], strides = [1, 1, 1]} : vector<8x16x4xf32> to vector<1x16x4xf32>
    %390 = vector.shape_cast %389 : vector<1x16x4xf32> to vector<16x4xf32>
    %cst_93 = arith.constant dense<0.000000e+00> : vector<2x4xf32>
    %391 = tpu.matmul %388, %390, %cst_93 {dimension_numbers = #tpu.dot_dimension_numbers<[1], [0], [0], [1], [0, 0, 1, 1], [], []>} : vector<2x16xf32>, vector<16x4xf32>, vector<2x4xf32> -> vector<2x4xf32>
    %392 = arith.addf %387, %391 : vector<2x4xf32>
    %393 = arith.mulf %352, %356 : vector<2x16xf32>
    %394 = vector.extract_strided_slice %267 {offsets = [7, 0, 0], sizes = [1, 16, 4], strides = [1, 1, 1]} : vector<8x16x4xf32> to vector<1x16x4xf32>
    %395 = vector.shape_cast %394 : vector<1x16x4xf32> to vector<16x4xf32>
    %cst_94 = arith.constant dense<0.000000e+00> : vector<2x4xf32>
    %396 = tpu.matmul %393, %395, %cst_94 {dimension_numbers = #tpu.dot_dimension_numbers<[1], [0], [0], [1], [0, 0, 1, 1], [], []>} : vector<2x16xf32>, vector<16x4xf32>, vector<2x4xf32> -> vector<2x4xf32>
    %397 = arith.addf %392, %396 : vector<2x4xf32>
    %398 = vector.broadcast %269 : vector<1x4xf32> to vector<2x4xf32>
    %399 = arith.addf %397, %398 : vector<2x4xf32>
    %c0_95 = arith.constant 0 : index
    %c0_96 = arith.constant 0 : index
    %400 = vector.load %arg13[%c0_95, %c0_96] : memref<2x4xf32, #tpu.memory_space<vmem>>, vector<2x4xf32>
    tpu.vector_store %arg13[%c0_95, %c0_96], %399 {strides = array<i32>} : memref<2x4xf32, #tpu.memory_space<vmem>>, vector<2x4xf32>,
    return
  }
}

</mosaic_0001>

<llo_original>
// kernel: tpu_custom_call.1
$region0: #{tpu_custom_call.1}
  #allocation0 [shape = 'u32[]', space=smem, size = 0x4, offset = 0x4, fixed_abs, tag = 'smem constant byte address 0x4 - core index']
  #allocation1 [shape = 'u32[144,128]{1,0:T(1,128)}', space=vmem, size = 0x12000, scoped, tag = 'internal scratch']
  %s0 = inlined_call_operand.vmem [shape: f32[8], index: 0, kind: input, shape index: {}]
  %s1 = inlined_call_operand.vmem [shape: f32[8], index: 1, kind: input, shape index: {}]
  %s2 = inlined_call_operand.vmem [shape: f32[8], index: 2, kind: input, shape index: {}]
  %s3 = inlined_call_operand.vmem [shape: f32[2,8], index: 3, kind: input, shape index: {}]
  %s4 = inlined_call_operand.vmem [shape: f32[8,8,32], index: 4, kind: input, shape index: {}]
  %s5 = inlined_call_operand.vmem [shape: f32[1,8], index: 5, kind: input, shape index: {}]
  %s6 = inlined_call_operand.vmem [shape: f32[1,32], index: 6, kind: input, shape index: {}]
  %s7 = inlined_call_operand.vmem [shape: f32[8,32,16], index: 7, kind: input, shape index: {}]
  %s8 = inlined_call_operand.vmem [shape: f32[1,32], index: 8, kind: input, shape index: {}]
  %s9 = inlined_call_operand.vmem [shape: f32[1,16], index: 9, kind: input, shape index: {}]
  %s10 = inlined_call_operand.vmem [shape: f32[8,16,4], index: 10, kind: input, shape index: {}]
  %s11 = inlined_call_operand.vmem [shape: f32[1,16], index: 11, kind: input, shape index: {}]
  %s12 = inlined_call_operand.vmem [shape: f32[1,4], index: 12, kind: input, shape index: {}]
  %s13 = inlined_call_operand.hbm [shape: f32[2,4], index: 13, kind: output, shape index: {}]
  %s14 = sld [smem:[#allocation0]]
  $region74: #{tpu_custom_call.1} parent=0
    _
  %s16 = ssub.s32 1, %s14
  %s17 = scalar_select 0, %s16, %s14
  $region1: #{tpu_custom_call.1} parent=0
    #allocation2 [shape = 'u8[512]{0}', space=smem, size = 0x200, scoped, tag = 'input window, operand 0, single buffered']
    #allocation3 [shape = 's32[1]{0}', space=sflag, size = 0x4, scoped, tag = 'scoped memory for tpu_custom_call.1']
    #allocation4 [shape = 's32[1]{0}', space=sflag, size = 0x4, scoped, tag = 'scoped memory for tpu_custom_call.1']
    #allocation5 [shape = 'u8[512]{0}', space=smem, size = 0x200, scoped, tag = 'input window, operand 1, single buffered']
    #allocation6 [shape = 's32[1]{0}', space=sflag, size = 0x4, scoped, tag = 'scoped memory for tpu_custom_call.1']
    #allocation7 [shape = 'u8[512]{0}', space=smem, size = 0x200, scoped, tag = 'input window, operand 2, single buffered']
    #allocation8 [shape = 'u8[1024]{0}', space=vmem, size = 0x400, scoped, tag = 'output window, operand 0, single buffered']
    %18 = vsyncpa [#allocation4], 0
    %19 = vsyncpa [#allocation6], 0
    %20 = vsyncpa [#allocation3], 0
    // Predicated region
    $region2: #{tpu_custom_call.1} parent=1 // pred_check
      _
    $region3: #{tpu_custom_call.1} parent=1 // pred_check_branch
      %22 = sbr.rel (0) target = $region5
    $region4: #{tpu_custom_call.1} parent=1 // pred_region
      %s24 = ssub.s32 16, 16
      %25 = vsyncadd [#allocation4], %s24
      %s27 = sshll.u32 %s0, 4
      %s28 = int_to_ptr.vmem [resolvable:$true] %s27
      %30 = dma.vmem_to_smem %s28, 16, [#allocation2], [#allocation4]
    $region5: #{tpu_custom_call.1} parent=1 // pred_fallthru
      _
    // Predicated region
    $region6: #{tpu_custom_call.1} parent=1 // pred_check
      _
    $region7: #{tpu_custom_call.1} parent=1 // pred_check_branch
      %32 = sbr.rel (0) target = $region9
    $region8: #{tpu_custom_call.1} parent=1 // pred_region
      %s34 = ssub.s32 16, 16
      %35 = vsyncadd [#allocation6], %s34
      %s37 = sshll.u32 %s1, 4
      %s38 = int_to_ptr.vmem [resolvable:$true] %s37
      %40 = dma.vmem_to_smem %s38, 16, [#allocation5], [#allocation6]
    $region9: #{tpu_custom_call.1} parent=1 // pred_fallthru
      _
    // Predicated region
    $region10: #{tpu_custom_call.1} parent=1 // pred_check
      _
    $region11: #{tpu_custom_call.1} parent=1 // pred_check_branch
      %42 = sbr.rel (0) target = $region13
    $region12: #{tpu_custom_call.1} parent=1 // pred_region
      %s44 = ssub.s32 16, 16
      %45 = vsyncadd [#allocation6], %s44
      %s47 = sshll.u32 %s2, 4
      %s48 = int_to_ptr.vmem [resolvable:$true] %s47
      %50 = dma.vmem_to_smem %s48, 16, [#allocation7], [#allocation6]
    $region13: #{tpu_custom_call.1} parent=1 // pred_fallthru
      _
    // Predicated region
    $region14: #{tpu_custom_call.1} parent=1 // pred_check
      _
    $region15: #{tpu_custom_call.1} parent=1 // pred_check_branch
      %52 = sbr.rel (0) target = $region17
    $region16: #{tpu_custom_call.1} parent=1 // pred_region
      _
    $region17: #{tpu_custom_call.1} parent=1 // pred_fallthru
      _
    // Predicated region
    $region18: #{tpu_custom_call.1} parent=1 // pred_check
      _
    $region19: #{tpu_custom_call.1} parent=1 // pred_check_branch
      %54 = sbr.rel (0) target = $region21
    $region20: #{tpu_custom_call.1} parent=1 // pred_region
      _
    $region21: #{tpu_custom_call.1} parent=1 // pred_fallthru
      _
    // Predicated region
    $region22: #{tpu_custom_call.1} parent=1 // pred_check
      _
    $region23: #{tpu_custom_call.1} parent=1 // pred_check_branch
      %56 = sbr.rel (0) target = $region25
    $region24: #{tpu_custom_call.1} parent=1 // pred_region
      _
    $region25: #{tpu_custom_call.1} parent=1 // pred_fallthru
      _
    // Predicated region
    $region26: #{tpu_custom_call.1} parent=1 // pred_check
      _
    $region27: #{tpu_custom_call.1} parent=1 // pred_check_branch
      %58 = sbr.rel (0) target = $region29
    $region28: #{tpu_custom_call.1} parent=1 // pred_region
      _
    $region29: #{tpu_custom_call.1} parent=1 // pred_fallthru
      _
    // Predicated region
    $region30: #{tpu_custom_call.1} parent=1 // pred_check
      _
    $region31: #{tpu_custom_call.1} parent=1 // pred_check_branch
      %60 = sbr.rel (0) target = $region33
    $region32: #{tpu_custom_call.1} parent=1 // pred_region
      _
    $region33: #{tpu_custom_call.1} parent=1 // pred_fallthru
      _
    // Predicated region
    $region34: #{tpu_custom_call.1} parent=1 // pred_check
      _
    $region35: #{tpu_custom_call.1} parent=1 // pred_check_branch
      %62 = sbr.rel (0) target = $region37
    $region36: #{tpu_custom_call.1} parent=1 // pred_region
      _
    $region37: #{tpu_custom_call.1} parent=1 // pred_fallthru
      _
    // Predicated region
    $region38: #{tpu_custom_call.1} parent=1 // pred_check
      _
    $region39: #{tpu_custom_call.1} parent=1 // pred_check_branch
      %64 = sbr.rel (0) target = $region41
    $region40: #{tpu_custom_call.1} parent=1 // pred_region
      _
    $region41: #{tpu_custom_call.1} parent=1 // pred_fallthru
      _
    // Predicated region
    $region42: #{tpu_custom_call.1} parent=1 // pred_check
      _
    $region43: #{tpu_custom_call.1} parent=1 // pred_check_branch
      %66 = sbr.rel (0) target = $region45
    $region44: #{tpu_custom_call.1} parent=1 // pred_region
      _
    $region45: #{tpu_custom_call.1} parent=1 // pred_fallthru
      _
    // Predicated region
    $region46: #{tpu_custom_call.1} parent=1 // pred_check
      _
    $region47: #{tpu_custom_call.1} parent=1 // pred_check_branch
      %68 = sbr.rel (0) target = $region49
    $region48: #{tpu_custom_call.1} parent=1 // pred_region
      _
    $region49: #{tpu_custom_call.1} parent=1 // pred_fallthru
      _
    // Predicated region
    $region50: #{tpu_custom_call.1} parent=1 // pred_check
      _
    $region51: #{tpu_custom_call.1} parent=1 // pred_check_branch
      %70 = sbr.rel (0) target = $region53
    $region52: #{tpu_custom_call.1} parent=1 // pred_region
      _
    $region53: #{tpu_custom_call.1} parent=1 // pred_fallthru
      _
    // Predicated region
    $region54: #{tpu_custom_call.1} parent=1 // pred_check
      _
    $region55: #{tpu_custom_call.1} parent=1 // pred_check_branch
      %72 = sbr.rel (0) target = $region57
    $region56: #{tpu_custom_call.1} parent=1 // pred_region
      %73 = dma.done [#allocation4], 16
    $region57: #{tpu_custom_call.1} parent=1 // pred_fallthru
      _
    // Predicated region
    $region58: #{tpu_custom_call.1} parent=1 // pred_check
      _
    $region59: #{tpu_custom_call.1} parent=1 // pred_check_branch
      %75 = sbr.rel (0) target = $region61
    $region60: #{tpu_custom_call.1} parent=1 // pred_region
      %76 = dma.done [#allocation6], 16
    $region61: #{tpu_custom_call.1} parent=1 // pred_fallthru
      _
    // Predicated region
    $region62: #{tpu_custom_call.1} parent=1 // pred_check
      _
    $region63: #{tpu_custom_call.1} parent=1 // pred_check_branch
      %78 = sbr.rel (0) target = $region65
    $region64: #{tpu_custom_call.1} parent=1 // pred_region
      %79 = dma.done [#allocation6], 16
    $region65: #{tpu_custom_call.1} parent=1 // pred_fallthru
      _
    %80 = sfence
    %v81 = vld [vmem:[%s3] sm:$0x3]
    %v82 = vld [vmem:[%s4] sm:$0xff]
    %v83 = vld [vmem:[%s4 + $0x8] sm:$0xff]
    %v84 = vld [vmem:[%s4 + $0x10] sm:$0xff]
    %v85 = vld [vmem:[%s4 + $0x18] sm:$0xff]
    %v86 = vld [vmem:[%s4 + $0x20] sm:$0xff]
    %v87 = vld [vmem:[%s4 + $0x28] sm:$0xff]
    %v88 = vld [vmem:[%s4 + $0x30] sm:$0xff]
    %v89 = vld [vmem:[%s4 + $0x38] sm:$0xff]
    %v90 = vld [vmem:[%s5] sm:$0x1]
    %v91 = vld [vmem:[%s6] sm:$0x1]
    %v93 = vlaneseq
    %v94 = vshrl.u32 %v93, 7
    %v95 = vsub.s32 0, %v94
    %v96 = vrot.slane %v90, %v95
    %v98 = vmul.f32 %v81, %v96
    %v99 = vtanh.pop %v98
    %s100 = sld [smem:[#allocation2]]
    %v101 = vstv %s100
    %v102 = vsub.f32 %v99, %v101
    %v103 = vand.u32 2147483647, %v102
    %v104 = vmul.f32 %v103, %v103
    %v105 = vmul.f32 %v104, %v103
    %v106 = vsub.f32 0.0, %v105
    %v107 = vmul.f32 %v106, 1.442695
    %v108 = vpow.pop %v107
    %v109 = vadd.f32 %v108, 0.0
    %s110 = sld [smem:[#allocation2 + $0x1]]
    %v111 = vstv %s110
    %v112 = vsub.f32 %v99, %v111
    %v113 = vand.u32 2147483647, %v112
    %v114 = vmul.f32 %v113, %v113
    %v115 = vmul.f32 %v114, %v113
    %v116 = vsub.f32 0.0, %v115
    %v117 = vmul.f32 %v116, 1.442695
    %v118 = vpow.pop %v117
    %v119 = vadd.f32 %v109, %v118
    %s120 = sld [smem:[#allocation2 + $0x2]]
    %v121 = vstv %s120
    %v122 = vsub.f32 %v99, %v121
    %v123 = vand.u32 2147483647, %v122
    %v124 = vmul.f32 %v123, %v123
    %v125 = vmul.f32 %v124, %v123
    %v126 = vsub.f32 0.0, %v125
    %v127 = vmul.f32 %v126, 1.442695
    %v128 = vpow.pop %v127
    %v129 = vadd.f32 %v119, %v128
    %s130 = sld [smem:[#allocation2 + $0x3]]
    %v131 = vstv %s130
    %v132 = vsub.f32 %v99, %v131
    %v133 = vand.u32 2147483647, %v132
    %v134 = vmul.f32 %v133, %v133
    %v135 = vmul.f32 %v134, %v133
    %v136 = vsub.f32 0.0, %v135
    %v137 = vmul.f32 %v136, 1.442695
    %v138 = vpow.pop %v137
    %v139 = vadd.f32 %v129, %v138
    %s140 = sld [smem:[#allocation2 + $0x4]]
    %v141 = vstv %s140
    %v142 = vsub.f32 %v99, %v141
    %v143 = vand.u32 2147483647, %v142
    %v144 = vmul.f32 %v143, %v143
    %v145 = vmul.f32 %v144, %v143
    %v146 = vsub.f32 0.0, %v145
    %v147 = vmul.f32 %v146, 1.442695
    %v148 = vpow.pop %v147
    %v149 = vadd.f32 %v139, %v148
    %s150 = sld [smem:[#allocation2 + $0x5]]
    %v151 = vstv %s150
    %v152 = vsub.f32 %v99, %v151
    %v153 = vand.u32 2147483647, %v152
    %v154 = vmul.f32 %v153, %v153
    %v155 = vmul.f32 %v154, %v153
    %v156 = vsub.f32 0.0, %v155
    %v157 = vmul.f32 %v156, 1.442695
    %v158 = vpow.pop %v157
    %v159 = vadd.f32 %v149, %v158
    %s160 = sld [smem:[#allocation2 + $0x6]]
    %v161 = vstv %s160
    %v162 = vsub.f32 %v99, %v161
    %v163 = vand.u32 2147483647, %v162
    %v164 = vmul.f32 %v163, %v163
    %v165 = vmul.f32 %v164, %v163
    %v166 = vsub.f32 0.0, %v165
    %v167 = vmul.f32 %v166, 1.442695
    %v168 = vpow.pop %v167
    %v169 = vadd.f32 %v159, %v168
    %s170 = sld [smem:[#allocation2 + $0x7]]
    %v171 = vstv %s170
    %v172 = vsub.f32 %v99, %v171
    %v173 = vand.u32 2147483647, %v172
    %v174 = vmul.f32 %v173, %v173
    %v175 = vmul.f32 %v174, %v173
    %v176 = vsub.f32 0.0, %v175
    %v177 = vmul.f32 %v176, 1.442695
    %v178 = vpow.pop %v177
    %v179 = vadd.f32 %v169, %v178
    %v180 = vadd.f32 %v179, 1e-08
    %v181 = vrcp.pop %v180
    %v182 = vmul.f32 %v108, %v181
    %v183 = vmul.f32 %v118, %v181
    %vm184 = vcmask 64512
    %v186 = vsel %vm184, %v183, 0
    %188 = vmatprep.subr.mxu0 0.0
    %189 = vmatpush1.msra.mxu0 %v83
    %190 = vmatprep.subr.mxu0 0.0
    %191 = vmatpush1.msra.mxu0 0.0
    %192 = vmatprep.subr.mxu0 0.0
    %193 = vmatpush1.msra.mxu0 0.0
    %194 = vmatprep.subr.mxu0 0.0
    %195 = vmatpush1.msra.mxu0 0.0
    %196 = vmatprep.subr.mxu0 0.0
    %197 = vmatpush1.msra.mxu0 0.0
    %198 = vmatprep.subr.mxu0 0.0
    %199 = vmatpush1.msra.mxu0 0.0
    %200 = vmatprep.subr.mxu0 0.0
    %201 = vmatpush1.msra.mxu0 0.0
    %202 = vmatprep.subr.mxu0 0.0
    %203 = vmatpush1.msra.mxu0 0.0
    %204 = vmatprep.subr.mxu0 0.0
    %205 = vmatpush1.msra.mxu0 0.0
    %206 = vmatprep.subr.mxu0 0.0
    %207 = vmatpush1.msra.mxu0 0.0
    %208 = vmatprep.subr.mxu0 0.0
    %209 = vmatpush1.msra.mxu0 0.0
    %210 = vmatprep.subr.mxu0 0.0
    %211 = vmatpush1.msra.mxu0 0.0
    %212 = vmatprep.subr.mxu0 0.0
    %213 = vmatpush1.msra.mxu0 0.0
    %214 = vmatprep.subr.mxu0 0.0
    %215 = vmatpush1.msra.mxu0 0.0
    %216 = vmatprep.subr.mxu0 0.0
    %217 = vmatpush1.msra.mxu0 0.0
    %218 = vmatprep.subr.mxu0 0.0
    %219 = vmatpush1.msra.mxu0 0.0
    %220 = vmatprep.subr.mxu0 0.0
    %221 = vmatpush1.msra.mxu0 0.0
    %222 = vmatprep.subr.mxu0 0.0
    %223 = vmatpush1.msra.mxu0 0.0
    %224 = vmatprep.subr.mxu0 0.0
    %225 = vmatpush1.msra.mxu0 0.0
    %226 = vmatprep.subr.mxu0 0.0
    %227 = vmatpush1.msra.mxu0 0.0
    %228 = vmatprep.subr.mxu0 0.0
    %229 = vmatpush1.msra.mxu0 0.0
    %230 = vmatprep.subr.mxu0 0.0
    %231 = vmatpush1.msra.mxu0 0.0
    %232 = vmatprep.subr.mxu0 0.0
    %233 = vmatpush1.msra.mxu0 0.0
    %234 = vmatprep.subr.mxu0 0.0
    %235 = vmatpush1.msra.mxu0 0.0
    %236 = vmatprep.subr.mxu0 0.0
    %237 = vmatpush1.msra.mxu0 0.0
    %238 = vmatprep.subr.mxu0 0.0
    %239 = vmatpush1.msra.mxu0 0.0
    %240 = vmatprep.subr.mxu0 0.0
    %241 = vmatpush1.msra.mxu0 0.0
    %242 = vmatprep.subr.mxu0 0.0
    %243 = vmatpush1.msra.mxu0 0.0
    %244 = vmatprep.subr.mxu0 0.0
    %245 = vmatpush1.msra.mxu0 0.0
    %246 = vmatprep.subr.mxu0 0.0
    %247 = vmatpush1.msra.mxu0 0.0
    %248 = vmatprep.subr.mxu0 0.0
    %249 = vmatpush1.msra.mxu0 0.0
    %250 = vmatprep.subr.mxu0 0.0
    %251 = vmatpush1.msra.mxu0 0.0
    %252 = vmatprep.mubr.f32.mxu0 0.0
    %253 = vmatmul.mubr.f32.gmra.mrb[0].mxu0 %v186
    %v254 = vpop.f32.mrb[0].mxu0
    %v255 = vadd.f32 0.0, %v254
    %v256 = vpop.f32.mrb[0].mxu0
    %257 = vdwg.mxu0
    %v259 = vsel %vm184, %v182, 0
    %261 = vmatprep.subr.mxu0 0.0
    %262 = vmatpush1.msra.mxu0 %v82
    %263 = vmatprep.subr.mxu0 0.0
    %264 = vmatpush1.msra.mxu0 0.0
    %265 = vmatprep.subr.mxu0 0.0
    %266 = vmatpush1.msra.mxu0 0.0
    %267 = vmatprep.subr.mxu0 0.0
    %268 = vmatpush1.msra.mxu0 0.0
    %269 = vmatprep.subr.mxu0 0.0
    %270 = vmatpush1.msra.mxu0 0.0
    %271 = vmatprep.subr.mxu0 0.0
    %272 = vmatpush1.msra.mxu0 0.0
    %273 = vmatprep.subr.mxu0 0.0
    %274 = vmatpush1.msra.mxu0 0.0
    %275 = vmatprep.subr.mxu0 0.0
    %276 = vmatpush1.msra.mxu0 0.0
    %277 = vmatprep.subr.mxu0 0.0
    %278 = vmatpush1.msra.mxu0 0.0
    %279 = vmatprep.subr.mxu0 0.0
    %280 = vmatpush1.msra.mxu0 0.0
    %281 = vmatprep.subr.mxu0 0.0
    %282 = vmatpush1.msra.mxu0 0.0
    %283 = vmatprep.subr.mxu0 0.0
    %284 = vmatpush1.msra.mxu0 0.0
    %285 = vmatprep.subr.mxu0 0.0
    %286 = vmatpush1.msra.mxu0 0.0
    %287 = vmatprep.subr.mxu0 0.0
    %288 = vmatpush1.msra.mxu0 0.0
    %289 = vmatprep.subr.mxu0 0.0
    %290 = vmatpush1.msra.mxu0 0.0
    %291 = vmatprep.subr.mxu0 0.0
    %292 = vmatpush1.msra.mxu0 0.0
    %293 = vmatprep.subr.mxu0 0.0
    %294 = vmatpush1.msra.mxu0 0.0
    %295 = vmatprep.subr.mxu0 0.0
    %296 = vmatpush1.msra.mxu0 0.0
    %297 = vmatprep.subr.mxu0 0.0
    %298 = vmatpush1.msra.mxu0 0.0
    %299 = vmatprep.subr.mxu0 0.0
    %300 = vmatpush1.msra.mxu0 0.0
    %301 = vmatprep.subr.mxu0 0.0
    %302 = vmatpush1.msra.mxu0 0.0
    %303 = vmatprep.subr.mxu0 0.0
    %304 = vmatpush1.msra.mxu0 0.0
    %305 = vmatprep.subr.mxu0 0.0
    %306 = vmatpush1.msra.mxu0 0.0
    %307 = vmatprep.subr.mxu0 0.0
    %308 = vmatpush1.msra.mxu0 0.0
    %309 = vmatprep.subr.mxu0 0.0
    %310 = vmatpush1.msra.mxu0 0.0
    %311 = vmatprep.subr.mxu0 0.0
    %312 = vmatpush1.msra.mxu0 0.0
    %313 = vmatprep.subr.mxu0 0.0
    %314 = vmatpush1.msra.mxu0 0.0
    %315 = vmatprep.subr.mxu0 0.0
    %316 = vmatpush1.msra.mxu0 0.0
    %317 = vmatprep.subr.mxu0 0.0
    %318 = vmatpush1.msra.mxu0 0.0
    %319 = vmatprep.subr.mxu0 0.0
    %320 = vmatpush1.msra.mxu0 0.0
    %321 = vmatprep.subr.mxu0 0.0
    %322 = vmatpush1.msra.mxu0 0.0
    %323 = vmatprep.subr.mxu0 0.0
    %324 = vmatpush1.msra.mxu0 0.0
    %325 = vmatprep.mubr.f32.mxu0 0.0
    %326 = vmatmul.mubr.f32.gmra.mrb[0].mxu0 %v259
    %v327 = vpop.f32.mrb[0].mxu0
    %v328 = vadd.f32 %v255, %v327
    %v329 = vpop.f32.mrb[0].mxu0
    %330 = vdwg.mxu0
    %v331 = vmul.f32 %v128, %v181
    %v333 = vsel %vm184, %v331, 0
    %335 = vmatprep.subr.mxu0 0.0
    %336 = vmatpush1.msra.mxu0 %v84
    %337 = vmatprep.subr.mxu0 0.0
    %338 = vmatpush1.msra.mxu0 0.0
    %339 = vmatprep.subr.mxu0 0.0
    %340 = vmatpush1.msra.mxu0 0.0
    %341 = vmatprep.subr.mxu0 0.0
    %342 = vmatpush1.msra.mxu0 0.0
    %343 = vmatprep.subr.mxu0 0.0
    %344 = vmatpush1.msra.mxu0 0.0
    %345 = vmatprep.subr.mxu0 0.0
    %346 = vmatpush1.msra.mxu0 0.0
    %347 = vmatprep.subr.mxu0 0.0
    %348 = vmatpush1.msra.mxu0 0.0
    %349 = vmatprep.subr.mxu0 0.0
    %350 = vmatpush1.msra.mxu0 0.0
    %351 = vmatprep.subr.mxu0 0.0
    %352 = vmatpush1.msra.mxu0 0.0
    %353 = vmatprep.subr.mxu0 0.0
    %354 = vmatpush1.msra.mxu0 0.0
    %355 = vmatprep.subr.mxu0 0.0
    %356 = vmatpush1.msra.mxu0 0.0
    %357 = vmatprep.subr.mxu0 0.0
    %358 = vmatpush1.msra.mxu0 0.0
    %359 = vmatprep.subr.mxu0 0.0
    %360 = vmatpush1.msra.mxu0 0.0
    %361 = vmatprep.subr.mxu0 0.0
    %362 = vmatpush1.msra.mxu0 0.0
    %363 = vmatprep.subr.mxu0 0.0
    %364 = vmatpush1.msra.mxu0 0.0
    %365 = vmatprep.subr.mxu0 0.0
    %366 = vmatpush1.msra.mxu0 0.0
    %367 = vmatprep.subr.mxu0 0.0
    %368 = vmatpush1.msra.mxu0 0.0
    %369 = vmatprep.subr.mxu0 0.0
    %370 = vmatpush1.msra.mxu0 0.0
    %371 = vmatprep.subr.mxu0 0.0
    %372 = vmatpush1.msra.mxu0 0.0
    %373 = vmatprep.subr.mxu0 0.0
    %374 = vmatpush1.msra.mxu0 0.0
    %375 = vmatprep.subr.mxu0 0.0
    %376 = vmatpush1.msra.mxu0 0.0
    %377 = vmatprep.subr.mxu0 0.0
    %378 = vmatpush1.msra.mxu0 0.0
    %379 = vmatprep.subr.mxu0 0.0
    %380 = vmatpush1.msra.mxu0 0.0
    %381 = vmatprep.subr.mxu0 0.0
    %382 = vmatpush1.msra.mxu0 0.0
    %383 = vmatprep.subr.mxu0 0.0
    %384 = vmatpush1.msra.mxu0 0.0
    %385 = vmatprep.subr.mxu0 0.0
    %386 = vmatpush1.msra.mxu0 0.0
    %387 = vmatprep.subr.mxu0 0.0
    %388 = vmatpush1.msra.mxu0 0.0
    %389 = vmatprep.subr.mxu0 0.0
    %390 = vmatpush1.msra.mxu0 0.0
    %391 = vmatprep.subr.mxu0 0.0
    %392 = vmatpush1.msra.mxu0 0.0
    %393 = vmatprep.subr.mxu0 0.0
    %394 = vmatpush1.msra.mxu0 0.0
    %395 = vmatprep.subr.mxu0 0.0
    %396 = vmatpush1.msra.mxu0 0.0
    %397 = vmatprep.subr.mxu0 0.0
    %398 = vmatpush1.msra.mxu0 0.0
    %399 = vmatprep.mubr.f32.mxu0 0.0
    %400 = vmatmul.mubr.f32.gmra.mrb[0].mxu0 %v333
    %v401 = vpop.f32.mrb[0].mxu0
    %v402 = vadd.f32 0.0, %v401
    %v403 = vpop.f32.mrb[0].mxu0
    %404 = vdwg.mxu0
    %v405 = vadd.f32 %v328, %v402
    %v406 = vmul.f32 %v138, %v181
    %v408 = vsel %vm184, %v406, 0
    %410 = vmatprep.subr.mxu0 0.0
    %411 = vmatpush1.msra.mxu0 %v85
    %412 = vmatprep.subr.mxu0 0.0
    %413 = vmatpush1.msra.mxu0 0.0
    %414 = vmatprep.subr.mxu0 0.0
    %415 = vmatpush1.msra.mxu0 0.0
    %416 = vmatprep.subr.mxu0 0.0
    %417 = vmatpush1.msra.mxu0 0.0
    %418 = vmatprep.subr.mxu0 0.0
    %419 = vmatpush1.msra.mxu0 0.0
    %420 = vmatprep.subr.mxu0 0.0
    %421 = vmatpush1.msra.mxu0 0.0
    %422 = vmatprep.subr.mxu0 0.0
    %423 = vmatpush1.msra.mxu0 0.0
    %424 = vmatprep.subr.mxu0 0.0
    %425 = vmatpush1.msra.mxu0 0.0
    %426 = vmatprep.subr.mxu0 0.0
    %427 = vmatpush1.msra.mxu0 0.0
    %428 = vmatprep.subr.mxu0 0.0
    %429 = vmatpush1.msra.mxu0 0.0
    %430 = vmatprep.subr.mxu0 0.0
    %431 = vmatpush1.msra.mxu0 0.0
    %432 = vmatprep.subr.mxu0 0.0
    %433 = vmatpush1.msra.mxu0 0.0
    %434 = vmatprep.subr.mxu0 0.0
    %435 = vmatpush1.msra.mxu0 0.0
    %436 = vmatprep.subr.mxu0 0.0
    %437 = vmatpush1.msra.mxu0 0.0
    %438 = vmatprep.subr.mxu0 0.0
    %439 = vmatpush1.msra.mxu0 0.0
    %440 = vmatprep.subr.mxu0 0.0
    %441 = vmatpush1.msra.mxu0 0.0
    %442 = vmatprep.subr.mxu0 0.0
    %443 = vmatpush1.msra.mxu0 0.0
    %444 = vmatprep.subr.mxu0 0.0
    %445 = vmatpush1.msra.mxu0 0.0
    %446 = vmatprep.subr.mxu0 0.0
    %447 = vmatpush1.msra.mxu0 0.0
    %448 = vmatprep.subr.mxu0 0.0
    %449 = vmatpush1.msra.mxu0 0.0
    %450 = vmatprep.subr.mxu0 0.0
    %451 = vmatpush1.msra.mxu0 0.0
    %452 = vmatprep.subr.mxu0 0.0
    %453 = vmatpush1.msra.mxu0 0.0
    %454 = vmatprep.subr.mxu0 0.0
    %455 = vmatpush1.msra.mxu0 0.0
    %456 = vmatprep.subr.mxu0 0.0
    %457 = vmatpush1.msra.mxu0 0.0
    %458 = vmatprep.subr.mxu0 0.0
    %459 = vmatpush1.msra.mxu0 0.0
    %460 = vmatprep.subr.mxu0 0.0
    %461 = vmatpush1.msra.mxu0 0.0
    %462 = vmatprep.subr.mxu0 0.0
    %463 = vmatpush1.msra.mxu0 0.0
    %464 = vmatprep.subr.mxu0 0.0
    %465 = vmatpush1.msra.mxu0 0.0
    %466 = vmatprep.subr.mxu0 0.0
    %467 = vmatpush1.msra.mxu0 0.0
    %468 = vmatprep.subr.mxu0 0.0
    %469 = vmatpush1.msra.mxu0 0.0
    %470 = vmatprep.subr.mxu0 0.0
    %471 = vmatpush1.msra.mxu0 0.0
    %472 = vmatprep.subr.mxu0 0.0
    %473 = vmatpush1.msra.mxu0 0.0
    %474 = vmatprep.mubr.f32.mxu0 0.0
    %475 = vmatmul.mubr.f32.gmra.mrb[0].mxu0 %v408
    %v476 = vpop.f32.mrb[0].mxu0
    %v477 = vadd.f32 0.0, %v476
    %v478 = vpop.f32.mrb[0].mxu0
    %479 = vdwg.mxu0
    %v480 = vadd.f32 %v405, %v477
    %v481 = vmul.f32 %v148, %v181
    %v483 = vsel %vm184, %v481, 0
    %485 = vmatprep.subr.mxu0 0.0
    %486 = vmatpush1.msra.mxu0 %v86
    %487 = vmatprep.subr.mxu0 0.0
    %488 = vmatpush1.msra.mxu0 0.0
    %489 = vmatprep.subr.mxu0 0.0
    %490 = vmatpush1.msra.mxu0 0.0
    %491 = vmatprep.subr.mxu0 0.0
    %492 = vmatpush1.msra.mxu0 0.0
    %493 = vmatprep.subr.mxu0 0.0
    %494 = vmatpush1.msra.mxu0 0.0
    %495 = vmatprep.subr.mxu0 0.0
    %496 = vmatpush1.msra.mxu0 0.0
    %497 = vmatprep.subr.mxu0 0.0
    %498 = vmatpush1.msra.mxu0 0.0
    %499 = vmatprep.subr.mxu0 0.0
    %500 = vmatpush1.msra.mxu0 0.0
    %501 = vmatprep.subr.mxu0 0.0
    %502 = vmatpush1.msra.mxu0 0.0
    %503 = vmatprep.subr.mxu0 0.0
    %504 = vmatpush1.msra.mxu0 0.0
    %505 = vmatprep.subr.mxu0 0.0
    %506 = vmatpush1.msra.mxu0 0.0
    %507 = vmatprep.subr.mxu0 0.0
    %508 = vmatpush1.msra.mxu0 0.0
    %509 = vmatprep.subr.mxu0 0.0
    %510 = vmatpush1.msra.mxu0 0.0
    %511 = vmatprep.subr.mxu0 0.0
    %512 = vmatpush1.msra.mxu0 0.0
    %513 = vmatprep.subr.mxu0 0.0
    %514 = vmatpush1.msra.mxu0 0.0
    %515 = vmatprep.subr.mxu0 0.0
    %516 = vmatpush1.msra.mxu0 0.0
    %517 = vmatprep.subr.mxu0 0.0
    %518 = vmatpush1.msra.mxu0 0.0
    %519 = vmatprep.subr.mxu0 0.0
    %520 = vmatpush1.msra.mxu0 0.0
    %521 = vmatprep.subr.mxu0 0.0
    %522 = vmatpush1.msra.mxu0 0.0
    %523 = vmatprep.subr.mxu0 0.0
    %524 = vmatpush1.msra.mxu0 0.0
    %525 = vmatprep.subr.mxu0 0.0
    %526 = vmatpush1.msra.mxu0 0.0
    %527 = vmatprep.subr.mxu0 0.0
    %528 = vmatpush1.msra.mxu0 0.0
    %529 = vmatprep.subr.mxu0 0.0
    %530 = vmatpush1.msra.mxu0 0.0
    %531 = vmatprep.subr.mxu0 0.0
    %532 = vmatpush1.msra.mxu0 0.0
    %533 = vmatprep.subr.mxu0 0.0
    %534 = vmatpush1.msra.mxu0 0.0
    %535 = vmatprep.subr.mxu0 0.0
    %536 = vmatpush1.msra.mxu0 0.0
    %537 = vmatprep.subr.mxu0 0.0
    %538 = vmatpush1.msra.mxu0 0.0
    %539 = vmatprep.subr.mxu0 0.0
    %540 = vmatpush1.msra.mxu0 0.0
    %541 = vmatprep.subr.mxu0 0.0
    %542 = vmatpush1.msra.mxu0 0.0
    %543 = vmatprep.subr.mxu0 0.0
    %544 = vmatpush1.msra.mxu0 0.0
    %545 = vmatprep.subr.mxu0 0.0
    %546 = vmatpush1.msra.mxu0 0.0
    %547 = vmatprep.subr.mxu0 0.0
    %548 = vmatpush1.msra.mxu0 0.0
    %549 = vmatprep.mubr.f32.mxu0 0.0
    %550 = vmatmul.mubr.f32.gmra.mrb[0].mxu0 %v483
    %v551 = vpop.f32.mrb[0].mxu0
    %v552 = vadd.f32 0.0, %v551
    %v553 = vpop.f32.mrb[0].mxu0
    %554 = vdwg.mxu0
    %v555 = vadd.f32 %v480, %v552
    %v556 = vmul.f32 %v158, %v181
    %v558 = vsel %vm184, %v556, 0
    %560 = vmatprep.subr.mxu0 0.0
    %561 = vmatpush1.msra.mxu0 %v87
    %562 = vmatprep.subr.mxu0 0.0
    %563 = vmatpush1.msra.mxu0 0.0
    %564 = vmatprep.subr.mxu0 0.0
    %565 = vmatpush1.msra.mxu0 0.0
    %566 = vmatprep.subr.mxu0 0.0
    %567 = vmatpush1.msra.mxu0 0.0
    %568 = vmatprep.subr.mxu0 0.0
    %569 = vmatpush1.msra.mxu0 0.0
    %570 = vmatprep.subr.mxu0 0.0
    %571 = vmatpush1.msra.mxu0 0.0
    %572 = vmatprep.subr.mxu0 0.0
    %573 = vmatpush1.msra.mxu0 0.0
    %574 = vmatprep.subr.mxu0 0.0
    %575 = vmatpush1.msra.mxu0 0.0
    %576 = vmatprep.subr.mxu0 0.0
    %577 = vmatpush1.msra.mxu0 0.0
    %578 = vmatprep.subr.mxu0 0.0
    %579 = vmatpush1.msra.mxu0 0.0
    %580 = vmatprep.subr.mxu0 0.0
    %581 = vmatpush1.msra.mxu0 0.0
    %582 = vmatprep.subr.mxu0 0.0
    %583 = vmatpush1.msra.mxu0 0.0
    %584 = vmatprep.subr.mxu0 0.0
    %585 = vmatpush1.msra.mxu0 0.0
    %586 = vmatprep.subr.mxu0 0.0
    %587 = vmatpush1.msra.mxu0 0.0
    %588 = vmatprep.subr.mxu0 0.0
    %589 = vmatpush1.msra.mxu0 0.0
    %590 = vmatprep.subr.mxu0 0.0
    %591 = vmatpush1.msra.mxu0 0.0
    %592 = vmatprep.subr.mxu0 0.0
    %593 = vmatpush1.msra.mxu0 0.0
    %594 = vmatprep.subr.mxu0 0.0
    %595 = vmatpush1.msra.mxu0 0.0
    %596 = vmatprep.subr.mxu0 0.0
    %597 = vmatpush1.msra.mxu0 0.0
    %598 = vmatprep.subr.mxu0 0.0
    %599 = vmatpush1.msra.mxu0 0.0
    %600 = vmatprep.subr.mxu0 0.0
    %601 = vmatpush1.msra.mxu0 0.0
    %602 = vmatprep.subr.mxu0 0.0
    %603 = vmatpush1.msra.mxu0 0.0
    %604 = vmatprep.subr.mxu0 0.0
    %605 = vmatpush1.msra.mxu0 0.0
    %606 = vmatprep.subr.mxu0 0.0
    %607 = vmatpush1.msra.mxu0 0.0
    %608 = vmatprep.subr.mxu0 0.0
    %609 = vmatpush1.msra.mxu0 0.0
    %610 = vmatprep.subr.mxu0 0.0
    %611 = vmatpush1.msra.mxu0 0.0
    %612 = vmatprep.subr.mxu0 0.0
    %613 = vmatpush1.msra.mxu0 0.0
    %614 = vmatprep.subr.mxu0 0.0
    %615 = vmatpush1.msra.mxu0 0.0
    %616 = vmatprep.subr.mxu0 0.0
    %617 = vmatpush1.msra.mxu0 0.0
    %618 = vmatprep.subr.mxu0 0.0
    %619 = vmatpush1.msra.mxu0 0.0
    %620 = vmatprep.subr.mxu0 0.0
    %621 = vmatpush1.msra.mxu0 0.0
    %622 = vmatprep.subr.mxu0 0.0
    %623 = vmatpush1.msra.mxu0 0.0
    %624 = vmatprep.mubr.f32.mxu0 0.0
    %625 = vmatmul.mubr.f32.gmra.mrb[0].mxu0 %v558
    %v626 = vpop.f32.mrb[0].mxu0
    %v627 = vadd.f32 0.0, %v626
    %v628 = vpop.f32.mrb[0].mxu0
    %629 = vdwg.mxu0
    %v630 = vadd.f32 %v555, %v627
    %v631 = vmul.f32 %v168, %v181
    %v633 = vsel %vm184, %v631, 0
    %635 = vmatprep.subr.mxu0 0.0
    %636 = vmatpush1.msra.mxu0 %v88
    %637 = vmatprep.subr.mxu0 0.0
    %638 = vmatpush1.msra.mxu0 0.0
    %639 = vmatprep.subr.mxu0 0.0
    %640 = vmatpush1.msra.mxu0 0.0
    %641 = vmatprep.subr.mxu0 0.0
    %642 = vmatpush1.msra.mxu0 0.0
    %643 = vmatprep.subr.mxu0 0.0
    %644 = vmatpush1.msra.mxu0 0.0
    %645 = vmatprep.subr.mxu0 0.0
    %646 = vmatpush1.msra.mxu0 0.0
    %647 = vmatprep.subr.mxu0 0.0
    %648 = vmatpush1.msra.mxu0 0.0
    %649 = vmatprep.subr.mxu0 0.0
    %650 = vmatpush1.msra.mxu0 0.0
    %651 = vmatprep.subr.mxu0 0.0
    %652 = vmatpush1.msra.mxu0 0.0
    %653 = vmatprep.subr.mxu0 0.0
    %654 = vmatpush1.msra.mxu0 0.0
    %655 = vmatprep.subr.mxu0 0.0
    %656 = vmatpush1.msra.mxu0 0.0
    %657 = vmatprep.subr.mxu0 0.0
    %658 = vmatpush1.msra.mxu0 0.0
    %659 = vmatprep.subr.mxu0 0.0
    %660 = vmatpush1.msra.mxu0 0.0
    %661 = vmatprep.subr.mxu0 0.0
    %662 = vmatpush1.msra.mxu0 0.0
    %663 = vmatprep.subr.mxu0 0.0
    %664 = vmatpush1.msra.mxu0 0.0
    %665 = vmatprep.subr.mxu0 0.0
    %666 = vmatpush1.msra.mxu0 0.0
    %667 = vmatprep.subr.mxu0 0.0
    %668 = vmatpush1.msra.mxu0 0.0
    %669 = vmatprep.subr.mxu0 0.0
    %670 = vmatpush1.msra.mxu0 0.0
    %671 = vmatprep.subr.mxu0 0.0
    %672 = vmatpush1.msra.mxu0 0.0
    %673 = vmatprep.subr.mxu0 0.0
    %674 = vmatpush1.msra.mxu0 0.0
    %675 = vmatprep.subr.mxu0 0.0
    %676 = vmatpush1.msra.mxu0 0.0
    %677 = vmatprep.subr.mxu0 0.0
    %678 = vmatpush1.msra.mxu0 0.0
    %679 = vmatprep.subr.mxu0 0.0
    %680 = vmatpush1.msra.mxu0 0.0
    %681 = vmatprep.subr.mxu0 0.0
    %682 = vmatpush1.msra.mxu0 0.0
    %683 = vmatprep.subr.mxu0 0.0
    %684 = vmatpush1.msra.mxu0 0.0
    %685 = vmatprep.subr.mxu0 0.0
    %686 = vmatpush1.msra.mxu0 0.0
    %687 = vmatprep.subr.mxu0 0.0
    %688 = vmatpush1.msra.mxu0 0.0
    %689 = vmatprep.subr.mxu0 0.0
    %690 = vmatpush1.msra.mxu0 0.0
    %691 = vmatprep.subr.mxu0 0.0
    %692 = vmatpush1.msra.mxu0 0.0
    %693 = vmatprep.subr.mxu0 0.0
    %694 = vmatpush1.msra.mxu0 0.0
    %695 = vmatprep.subr.mxu0 0.0
    %696 = vmatpush1.msra.mxu0 0.0
    %697 = vmatprep.subr.mxu0 0.0
    %698 = vmatpush1.msra.mxu0 0.0
    %699 = vmatprep.mubr.f32.mxu0 0.0
    %700 = vmatmul.mubr.f32.gmra.mrb[0].mxu0 %v633
    %v701 = vpop.f32.mrb[0].mxu0
    %v702 = vadd.f32 0.0, %v701
    %v703 = vpop.f32.mrb[0].mxu0
    %704 = vdwg.mxu0
    %v705 = vadd.f32 %v630, %v702
    %v706 = vmul.f32 %v178, %v181
    %v708 = vsel %vm184, %v706, 0
    %710 = vmatprep.subr.mxu0 0.0
    %711 = vmatpush1.msra.mxu0 %v89
    %712 = vmatprep.subr.mxu0 0.0
    %713 = vmatpush1.msra.mxu0 0.0
    %714 = vmatprep.subr.mxu0 0.0
    %715 = vmatpush1.msra.mxu0 0.0
    %716 = vmatprep.subr.mxu0 0.0
    %717 = vmatpush1.msra.mxu0 0.0
    %718 = vmatprep.subr.mxu0 0.0
    %719 = vmatpush1.msra.mxu0 0.0
    %720 = vmatprep.subr.mxu0 0.0
    %721 = vmatpush1.msra.mxu0 0.0
    %722 = vmatprep.subr.mxu0 0.0
    %723 = vmatpush1.msra.mxu0 0.0
    %724 = vmatprep.subr.mxu0 0.0
    %725 = vmatpush1.msra.mxu0 0.0
    %726 = vmatprep.subr.mxu0 0.0
    %727 = vmatpush1.msra.mxu0 0.0
    %728 = vmatprep.subr.mxu0 0.0
    %729 = vmatpush1.msra.mxu0 0.0
    %730 = vmatprep.subr.mxu0 0.0
    %731 = vmatpush1.msra.mxu0 0.0
    %732 = vmatprep.subr.mxu0 0.0
    %733 = vmatpush1.msra.mxu0 0.0
    %734 = vmatprep.subr.mxu0 0.0
    %735 = vmatpush1.msra.mxu0 0.0
    %736 = vmatprep.subr.mxu0 0.0
    %737 = vmatpush1.msra.mxu0 0.0
    %738 = vmatprep.subr.mxu0 0.0
    %739 = vmatpush1.msra.mxu0 0.0
    %740 = vmatprep.subr.mxu0 0.0
    %741 = vmatpush1.msra.mxu0 0.0
    %742 = vmatprep.subr.mxu0 0.0
    %743 = vmatpush1.msra.mxu0 0.0
    %744 = vmatprep.subr.mxu0 0.0
    %745 = vmatpush1.msra.mxu0 0.0
    %746 = vmatprep.subr.mxu0 0.0
    %747 = vmatpush1.msra.mxu0 0.0
    %748 = vmatprep.subr.mxu0 0.0
    %749 = vmatpush1.msra.mxu0 0.0
    %750 = vmatprep.subr.mxu0 0.0
    %751 = vmatpush1.msra.mxu0 0.0
    %752 = vmatprep.subr.mxu0 0.0
    %753 = vmatpush1.msra.mxu0 0.0
    %754 = vmatprep.subr.mxu0 0.0
    %755 = vmatpush1.msra.mxu0 0.0
    %756 = vmatprep.subr.mxu0 0.0
    %757 = vmatpush1.msra.mxu0 0.0
    %758 = vmatprep.subr.mxu0 0.0
    %759 = vmatpush1.msra.mxu0 0.0
    %760 = vmatprep.subr.mxu0 0.0
    %761 = vmatpush1.msra.mxu0 0.0
    %762 = vmatprep.subr.mxu0 0.0
    %763 = vmatpush1.msra.mxu0 0.0
    %764 = vmatprep.subr.mxu0 0.0
    %765 = vmatpush1.msra.mxu0 0.0
    %766 = vmatprep.subr.mxu0 0.0
    %767 = vmatpush1.msra.mxu0 0.0
    %768 = vmatprep.subr.mxu0 0.0
    %769 = vmatpush1.msra.mxu0 0.0
    %770 = vmatprep.subr.mxu0 0.0
    %771 = vmatpush1.msra.mxu0 0.0
    %772 = vmatprep.subr.mxu0 0.0
    %773 = vmatpush1.msra.mxu0 0.0
    %774 = vmatprep.mubr.f32.mxu0 0.0
    %775 = vmatmul.mubr.f32.gmra.mrb[0].mxu0 %v708
    %v776 = vpop.f32.mrb[0].mxu0
    %v777 = vadd.f32 0.0, %v776
    %v778 = vpop.f32.mrb[0].mxu0
    %779 = vdwg.mxu0
    %v780 = vadd.f32 %v705, %v777
    %v782 = vlaneseq
    %v783 = vshrl.u32 %v782, 7
    %v784 = vsub.s32 0, %v783
    %v785 = vrot.slane %v91, %v784
    %v787 = vadd.f32 %v780, %v785
    %v788 = vld [vmem:[%s7] sm:$0xff]
    %v789 = vld [vmem:[%s7 + $0x8] sm:$0xff]
    %v790 = vld [vmem:[%s7 + $0x10] sm:$0xff]
    %v791 = vld [vmem:[%s7 + $0x18] sm:$0xff]
    %v792 = vld [vmem:[%s7 + $0x20] sm:$0xff]
    %v793 = vld [vmem:[%s7 + $0x28] sm:$0xff]
    %v794 = vld [vmem:[%s7 + $0x30] sm:$0xff]
    %v795 = vld [vmem:[%s7 + $0x38] sm:$0xff]
    %v796 = vld [vmem:[%s7 + $0x40] sm:$0xff]
    %v797 = vld [vmem:[%s7 + $0x48] sm:$0xff]
    %v798 = vld [vmem:[%s7 + $0x50] sm:$0xff]
    %v799 = vld [vmem:[%s7 + $0x58] sm:$0xff]
    %v800 = vld [vmem:[%s7 + $0x60] sm:$0xff]
    %v801 = vld [vmem:[%s7 + $0x68] sm:$0xff]
    %v802 = vld [vmem:[%s7 + $0x70] sm:$0xff]
    %v803 = vld [vmem:[%s7 + $0x78] sm:$0xff]
    %v804 = vld [vmem:[%s7 + $0x80] sm:$0xff]
    %v805 = vld [vmem:[%s7 + $0x88] sm:$0xff]
    %v806 = vld [vmem:[%s7 + $0x90] sm:$0xff]
    %v807 = vld [vmem:[%s7 + $0x98] sm:$0xff]
    %v808 = vld [vmem:[%s7 + $0xa0] sm:$0xff]
    %v809 = vld [vmem:[%s7 + $0xa8] sm:$0xff]
    %v810 = vld [vmem:[%s7 + $0xb0] sm:$0xff]
    %v811 = vld [vmem:[%s7 + $0xb8] sm:$0xff]
    %v812 = vld [vmem:[%s7 + $0xc0] sm:$0xff]
    %v813 = vld [vmem:[%s7 + $0xc8] sm:$0xff]
    %v814 = vld [vmem:[%s7 + $0xd0] sm:$0xff]
    %v815 = vld [vmem:[%s7 + $0xd8] sm:$0xff]
    %v816 = vld [vmem:[%s7 + $0xe0] sm:$0xff]
    %v817 = vld [vmem:[%s7 + $0xe8] sm:$0xff]
    %v818 = vld [vmem:[%s7 + $0xf0] sm:$0xff]
    %v819 = vld [vmem:[%s7 + $0xf8] sm:$0xff]
    %v820 = vld [vmem:[%s8] sm:$0x1]
    %v821 = vld [vmem:[%s9] sm:$0x1]
    %v823 = vlaneseq
    %v824 = vshrl.u32 %v823, 7
    %v825 = vsub.s32 0, %v824
    %v826 = vrot.slane %v820, %v825
    %v828 = vmul.f32 %v787, %v826
    %v829 = vtanh.pop %v828
    %s830 = sld [smem:[#allocation5]]
    %v831 = vstv %s830
    %v832 = vsub.f32 %v829, %v831
    %v833 = vand.u32 2147483647, %v832
    %v834 = vmul.f32 %v833, %v833
    %v835 = vmul.f32 %v834, %v833
    %v836 = vsub.f32 0.0, %v835
    %v837 = vmul.f32 %v836, 1.442695
    %v838 = vpow.pop %v837
    %v839 = vadd.f32 %v838, 0.0
    %s840 = sld [smem:[#allocation5 + $0x1]]
    %v841 = vstv %s840
    %v842 = vsub.f32 %v829, %v841
    %v843 = vand.u32 2147483647, %v842
    %v844 = vmul.f32 %v843, %v843
    %v845 = vmul.f32 %v844, %v843
    %v846 = vsub.f32 0.0, %v845
    %v847 = vmul.f32 %v846, 1.442695
    %v848 = vpow.pop %v847
    %v849 = vadd.f32 %v839, %v848
    %s850 = sld [smem:[#allocation5 + $0x2]]
    %v851 = vstv %s850
    %v852 = vsub.f32 %v829, %v851
    %v853 = vand.u32 2147483647, %v852
    %v854 = vmul.f32 %v853, %v853
    %v855 = vmul.f32 %v854, %v853
    %v856 = vsub.f32 0.0, %v855
    %v857 = vmul.f32 %v856, 1.442695
    %v858 = vpow.pop %v857
    %v859 = vadd.f32 %v849, %v858
    %s860 = sld [smem:[#allocation5 + $0x3]]
    %v861 = vstv %s860
    %v862 = vsub.f32 %v829, %v861
    %v863 = vand.u32 2147483647, %v862
    %v864 = vmul.f32 %v863, %v863
    %v865 = vmul.f32 %v864, %v863
    %v866 = vsub.f32 0.0, %v865
    %v867 = vmul.f32 %v866, 1.442695
    %v868 = vpow.pop %v867
    %v869 = vadd.f32 %v859, %v868
    %s870 = sld [smem:[#allocation5 + $0x4]]
    %v871 = vstv %s870
    %v872 = vsub.f32 %v829, %v871
    %v873 = vand.u32 2147483647, %v872
    %v874 = vmul.f32 %v873, %v873
    %v875 = vmul.f32 %v874, %v873
    %v876 = vsub.f32 0.0, %v875
    %v877 = vmul.f32 %v876, 1.442695
    %v878 = vpow.pop %v877
    %v879 = vadd.f32 %v869, %v878
    %s880 = sld [smem:[#allocation5 + $0x5]]
    %v881 = vstv %s880
    %v882 = vsub.f32 %v829, %v881
    %v883 = vand.u32 2147483647, %v882
    %v884 = vmul.f32 %v883, %v883
    %v885 = vmul.f32 %v884, %v883
    %v886 = vsub.f32 0.0, %v885
    %v887 = vmul.f32 %v886, 1.442695
    %v888 = vpow.pop %v887
    %v889 = vadd.f32 %v879, %v888
    %s890 = sld [smem:[#allocation5 + $0x6]]
    %v891 = vstv %s890
    %v892 = vsub.f32 %v829, %v891
    %v893 = vand.u32 2147483647, %v892
    %v894 = vmul.f32 %v893, %v893
    %v895 = vmul.f32 %v894, %v893
    %v896 = vsub.f32 0.0, %v895
    %v897 = vmul.f32 %v896, 1.442695
    %v898 = vpow.pop %v897
    %v899 = vadd.f32 %v889, %v898
    %s900 = sld [smem:[#allocation5 + $0x7]]
    %v901 = vstv %s900
    %v902 = vsub.f32 %v829, %v901
    %v903 = vand.u32 2147483647, %v902
    %v904 = vmul.f32 %v903, %v903
    %v905 = vmul.f32 %v904, %v903
    %v906 = vsub.f32 0.0, %v905
    %v907 = vmul.f32 %v906, 1.442695
    %v908 = vpow.pop %v907
    %v909 = vadd.f32 %v899, %v908
    %v910 = vadd.f32 %v909, 1e-08
    %v911 = vrcp.pop %v910
    %v912 = vmul.f32 %v838, %v911
    %v913 = vmul.f32 %v848, %v911
    %vm914 = vcmask 261120
    %v916 = vsel %vm914, %v913, 0
    %918 = vmatprep.subr.mxu0 0.0
    %919 = vmatpush1.msra.mxu0 %v792
    %920 = vmatprep.subr.mxu0 0.0
    %921 = vmatpush1.msra.mxu0 %v793
    %922 = vmatprep.subr.mxu0 0.0
    %923 = vmatpush1.msra.mxu0 %v794
    %924 = vmatprep.subr.mxu0 0.0
    %925 = vmatpush1.msra.mxu0 %v795
    %926 = vmatprep.subr.mxu0 0.0
    %927 = vmatpush1.msra.mxu0 0.0
    %928 = vmatprep.subr.mxu0 0.0
    %929 = vmatpush1.msra.mxu0 0.0
    %930 = vmatprep.subr.mxu0 0.0
    %931 = vmatpush1.msra.mxu0 0.0
    %932 = vmatprep.subr.mxu0 0.0
    %933 = vmatpush1.msra.mxu0 0.0
    %934 = vmatprep.subr.mxu0 0.0
    %935 = vmatpush1.msra.mxu0 0.0
    %936 = vmatprep.subr.mxu0 0.0
    %937 = vmatpush1.msra.mxu0 0.0
    %938 = vmatprep.subr.mxu0 0.0
    %939 = vmatpush1.msra.mxu0 0.0
    %940 = vmatprep.subr.mxu0 0.0
    %941 = vmatpush1.msra.mxu0 0.0
    %942 = vmatprep.subr.mxu0 0.0
    %943 = vmatpush1.msra.mxu0 0.0
    %944 = vmatprep.subr.mxu0 0.0
    %945 = vmatpush1.msra.mxu0 0.0
    %946 = vmatprep.subr.mxu0 0.0
    %947 = vmatpush1.msra.mxu0 0.0
    %948 = vmatprep.subr.mxu0 0.0
    %949 = vmatpush1.msra.mxu0 0.0
    %950 = vmatprep.subr.mxu0 0.0
    %951 = vmatpush1.msra.mxu0 0.0
    %952 = vmatprep.subr.mxu0 0.0
    %953 = vmatpush1.msra.mxu0 0.0
    %954 = vmatprep.subr.mxu0 0.0
    %955 = vmatpush1.msra.mxu0 0.0
    %956 = vmatprep.subr.mxu0 0.0
    %957 = vmatpush1.msra.mxu0 0.0
    %958 = vmatprep.subr.mxu0 0.0
    %959 = vmatpush1.msra.mxu0 0.0
    %960 = vmatprep.subr.mxu0 0.0
    %961 = vmatpush1.msra.mxu0 0.0
    %962 = vmatprep.subr.mxu0 0.0
    %963 = vmatpush1.msra.mxu0 0.0
    %964 = vmatprep.subr.mxu0 0.0
    %965 = vmatpush1.msra.mxu0 0.0
    %966 = vmatprep.subr.mxu0 0.0
    %967 = vmatpush1.msra.mxu0 0.0
    %968 = vmatprep.subr.mxu0 0.0
    %969 = vmatpush1.msra.mxu0 0.0
    %970 = vmatprep.subr.mxu0 0.0
    %971 = vmatpush1.msra.mxu0 0.0
    %972 = vmatprep.subr.mxu0 0.0
    %973 = vmatpush1.msra.mxu0 0.0
    %974 = vmatprep.subr.mxu0 0.0
    %975 = vmatpush1.msra.mxu0 0.0
    %976 = vmatprep.subr.mxu0 0.0
    %977 = vmatpush1.msra.mxu0 0.0
    %978 = vmatprep.subr.mxu0 0.0
    %979 = vmatpush1.msra.mxu0 0.0
    %980 = vmatprep.subr.mxu0 0.0
    %981 = vmatpush1.msra.mxu0 0.0
    %982 = vmatprep.mubr.f32.mxu0 0.0
    %983 = vmatmul.mubr.f32.gmra.mrb[0].mxu0 %v916
    %v984 = vpop.f32.mrb[0].mxu0
    %v985 = vadd.f32 0.0, %v984
    %v986 = vpop.f32.mrb[0].mxu0
    %987 = vdwg.mxu0
    %v989 = vsel %vm914, %v912, 0
    %991 = vmatprep.subr.mxu0 0.0
    %992 = vmatpush1.msra.mxu0 %v788
    %993 = vmatprep.subr.mxu0 0.0
    %994 = vmatpush1.msra.mxu0 %v789
    %995 = vmatprep.subr.mxu0 0.0
    %996 = vmatpush1.msra.mxu0 %v790
    %997 = vmatprep.subr.mxu0 0.0
    %998 = vmatpush1.msra.mxu0 %v791
    %999 = vmatprep.subr.mxu0 0.0
    %1000 = vmatpush1.msra.mxu0 0.0
    %1001 = vmatprep.subr.mxu0 0.0
    %1002 = vmatpush1.msra.mxu0 0.0
    %1003 = vmatprep.subr.mxu0 0.0
    %1004 = vmatpush1.msra.mxu0 0.0
    %1005 = vmatprep.subr.mxu0 0.0
    %1006 = vmatpush1.msra.mxu0 0.0
    %1007 = vmatprep.subr.mxu0 0.0
    %1008 = vmatpush1.msra.mxu0 0.0
    %1009 = vmatprep.subr.mxu0 0.0
    %1010 = vmatpush1.msra.mxu0 0.0
    %1011 = vmatprep.subr.mxu0 0.0
    %1012 = vmatpush1.msra.mxu0 0.0
    %1013 = vmatprep.subr.mxu0 0.0
    %1014 = vmatpush1.msra.mxu0 0.0
    %1015 = vmatprep.subr.mxu0 0.0
    %1016 = vmatpush1.msra.mxu0 0.0
    %1017 = vmatprep.subr.mxu0 0.0
    %1018 = vmatpush1.msra.mxu0 0.0
    %1019 = vmatprep.subr.mxu0 0.0
    %1020 = vmatpush1.msra.mxu0 0.0
    %1021 = vmatprep.subr.mxu0 0.0
    %1022 = vmatpush1.msra.mxu0 0.0
    %1023 = vmatprep.subr.mxu0 0.0
    %1024 = vmatpush1.msra.mxu0 0.0
    %1025 = vmatprep.subr.mxu0 0.0
    %1026 = vmatpush1.msra.mxu0 0.0
    %1027 = vmatprep.subr.mxu0 0.0
    %1028 = vmatpush1.msra.mxu0 0.0
    %1029 = vmatprep.subr.mxu0 0.0
    %1030 = vmatpush1.msra.mxu0 0.0
    %1031 = vmatprep.subr.mxu0 0.0
    %1032 = vmatpush1.msra.mxu0 0.0
    %1033 = vmatprep.subr.mxu0 0.0
    %1034 = vmatpush1.msra.mxu0 0.0
    %1035 = vmatprep.subr.mxu0 0.0
    %1036 = vmatpush1.msra.mxu0 0.0
    %1037 = vmatprep.subr.mxu0 0.0
    %1038 = vmatpush1.msra.mxu0 0.0
    %1039 = vmatprep.subr.mxu0 0.0
    %1040 = vmatpush1.msra.mxu0 0.0
    %1041 = vmatprep.subr.mxu0 0.0
    %1042 = vmatpush1.msra.mxu0 0.0
    %1043 = vmatprep.subr.mxu0 0.0
    %1044 = vmatpush1.msra.mxu0 0.0
    %1045 = vmatprep.subr.mxu0 0.0
    %1046 = vmatpush1.msra.mxu0 0.0
    %1047 = vmatprep.subr.mxu0 0.0
    %1048 = vmatpush1.msra.mxu0 0.0
    %1049 = vmatprep.subr.mxu0 0.0
    %1050 = vmatpush1.msra.mxu0 0.0
    %1051 = vmatprep.subr.mxu0 0.0
    %1052 = vmatpush1.msra.mxu0 0.0
    %1053 = vmatprep.subr.mxu0 0.0
    %1054 = vmatpush1.msra.mxu0 0.0
    %1055 = vmatprep.mubr.f32.mxu0 0.0
    %1056 = vmatmul.mubr.f32.gmra.mrb[0].mxu0 %v989
    %v1057 = vpop.f32.mrb[0].mxu0
    %v1058 = vadd.f32 %v985, %v1057
    %v1059 = vpop.f32.mrb[0].mxu0
    %1060 = vdwg.mxu0
    %v1061 = vmul.f32 %v858, %v911
    %v1063 = vsel %vm914, %v1061, 0
    %1065 = vmatprep.subr.mxu0 0.0
    %1066 = vmatpush1.msra.mxu0 %v796
    %1067 = vmatprep.subr.mxu0 0.0
    %1068 = vmatpush1.msra.mxu0 %v797
    %1069 = vmatprep.subr.mxu0 0.0
    %1070 = vmatpush1.msra.mxu0 %v798
    %1071 = vmatprep.subr.mxu0 0.0
    %1072 = vmatpush1.msra.mxu0 %v799
    %1073 = vmatprep.subr.mxu0 0.0
    %1074 = vmatpush1.msra.mxu0 0.0
    %1075 = vmatprep.subr.mxu0 0.0
    %1076 = vmatpush1.msra.mxu0 0.0
    %1077 = vmatprep.subr.mxu0 0.0
    %1078 = vmatpush1.msra.mxu0 0.0
    %1079 = vmatprep.subr.mxu0 0.0
    %1080 = vmatpush1.msra.mxu0 0.0
    %1081 = vmatprep.subr.mxu0 0.0
    %1082 = vmatpush1.msra.mxu0 0.0
    %1083 = vmatprep.subr.mxu0 0.0
    %1084 = vmatpush1.msra.mxu0 0.0
    %1085 = vmatprep.subr.mxu0 0.0
    %1086 = vmatpush1.msra.mxu0 0.0
    %1087 = vmatprep.subr.mxu0 0.0
    %1088 = vmatpush1.msra.mxu0 0.0
    %1089 = vmatprep.subr.mxu0 0.0
    %1090 = vmatpush1.msra.mxu0 0.0
    %1091 = vmatprep.subr.mxu0 0.0
    %1092 = vmatpush1.msra.mxu0 0.0
    %1093 = vmatprep.subr.mxu0 0.0
    %1094 = vmatpush1.msra.mxu0 0.0
    %1095 = vmatprep.subr.mxu0 0.0
    %1096 = vmatpush1.msra.mxu0 0.0
    %1097 = vmatprep.subr.mxu0 0.0
    %1098 = vmatpush1.msra.mxu0 0.0
    %1099 = vmatprep.subr.mxu0 0.0
    %1100 = vmatpush1.msra.mxu0 0.0
    %1101 = vmatprep.subr.mxu0 0.0
    %1102 = vmatpush1.msra.mxu0 0.0
    %1103 = vmatprep.subr.mxu0 0.0
    %1104 = vmatpush1.msra.mxu0 0.0
    %1105 = vmatprep.subr.mxu0 0.0
    %1106 = vmatpush1.msra.mxu0 0.0
    %1107 = vmatprep.subr.mxu0 0.0
    %1108 = vmatpush1.msra.mxu0 0.0
    %1109 = vmatprep.subr.mxu0 0.0
    %1110 = vmatpush1.msra.mxu0 0.0
    %1111 = vmatprep.subr.mxu0 0.0
    %1112 = vmatpush1.msra.mxu0 0.0
    %1113 = vmatprep.subr.mxu0 0.0
    %1114 = vmatpush1.msra.mxu0 0.0
    %1115 = vmatprep.subr.mxu0 0.0
    %1116 = vmatpush1.msra.mxu0 0.0
    %1117 = vmatprep.subr.mxu0 0.0
    %1118 = vmatpush1.msra.mxu0 0.0
    %1119 = vmatprep.subr.mxu0 0.0
    %1120 = vmatpush1.msra.mxu0 0.0
    %1121 = vmatprep.subr.mxu0 0.0
    %1122 = vmatpush1.msra.mxu0 0.0
    %1123 = vmatprep.subr.mxu0 0.0
    %1124 = vmatpush1.msra.mxu0 0.0
    %1125 = vmatprep.subr.mxu0 0.0
    %1126 = vmatpush1.msra.mxu0 0.0
    %1127 = vmatprep.subr.mxu0 0.0
    %1128 = vmatpush1.msra.mxu0 0.0
    %1129 = vmatprep.mubr.f32.mxu0 0.0
    %1130 = vmatmul.mubr.f32.gmra.mrb[0].mxu0 %v1063
    %v1131 = vpop.f32.mrb[0].mxu0
    %v1132 = vadd.f32 0.0, %v1131
    %v1133 = vpop.f32.mrb[0].mxu0
    %1134 = vdwg.mxu0
    %v1135 = vadd.f32 %v1058, %v1132
    %v1136 = vmul.f32 %v868, %v911
    %v1138 = vsel %vm914, %v1136, 0
    %1140 = vmatprep.subr.mxu0 0.0
    %1141 = vmatpush1.msra.mxu0 %v800
    %1142 = vmatprep.subr.mxu0 0.0
    %1143 = vmatpush1.msra.mxu0 %v801
    %1144 = vmatprep.subr.mxu0 0.0
    %1145 = vmatpush1.msra.mxu0 %v802
    %1146 = vmatprep.subr.mxu0 0.0
    %1147 = vmatpush1.msra.mxu0 %v803
    %1148 = vmatprep.subr.mxu0 0.0
    %1149 = vmatpush1.msra.mxu0 0.0
    %1150 = vmatprep.subr.mxu0 0.0
    %1151 = vmatpush1.msra.mxu0 0.0
    %1152 = vmatprep.subr.mxu0 0.0
    %1153 = vmatpush1.msra.mxu0 0.0
    %1154 = vmatprep.subr.mxu0 0.0
    %1155 = vmatpush1.msra.mxu0 0.0
    %1156 = vmatprep.subr.mxu0 0.0
    %1157 = vmatpush1.msra.mxu0 0.0
    %1158 = vmatprep.subr.mxu0 0.0
    %1159 = vmatpush1.msra.mxu0 0.0
    %1160 = vmatprep.subr.mxu0 0.0
    %1161 = vmatpush1.msra.mxu0 0.0
    %1162 = vmatprep.subr.mxu0 0.0
    %1163 = vmatpush1.msra.mxu0 0.0
    %1164 = vmatprep.subr.mxu0 0.0
    %1165 = vmatpush1.msra.mxu0 0.0
    %1166 = vmatprep.subr.mxu0 0.0
    %1167 = vmatpush1.msra.mxu0 0.0
    %1168 = vmatprep.subr.mxu0 0.0
    %1169 = vmatpush1.msra.mxu0 0.0
    %1170 = vmatprep.subr.mxu0 0.0
    %1171 = vmatpush1.msra.mxu0 0.0
    %1172 = vmatprep.subr.mxu0 0.0
    %1173 = vmatpush1.msra.mxu0 0.0
    %1174 = vmatprep.subr.mxu0 0.0
    %1175 = vmatpush1.msra.mxu0 0.0
    %1176 = vmatprep.subr.mxu0 0.0
    %1177 = vmatpush1.msra.mxu0 0.0
    %1178 = vmatprep.subr.mxu0 0.0
    %1179 = vmatpush1.msra.mxu0 0.0
    %1180 = vmatprep.subr.mxu0 0.0
    %1181 = vmatpush1.msra.mxu0 0.0
    %1182 = vmatprep.subr.mxu0 0.0
    %1183 = vmatpush1.msra.mxu0 0.0
    %1184 = vmatprep.subr.mxu0 0.0
    %1185 = vmatpush1.msra.mxu0 0.0
    %1186 = vmatprep.subr.mxu0 0.0
    %1187 = vmatpush1.msra.mxu0 0.0
    %1188 = vmatprep.subr.mxu0 0.0
    %1189 = vmatpush1.msra.mxu0 0.0
    %1190 = vmatprep.subr.mxu0 0.0
    %1191 = vmatpush1.msra.mxu0 0.0
    %1192 = vmatprep.subr.mxu0 0.0
    %1193 = vmatpush1.msra.mxu0 0.0
    %1194 = vmatprep.subr.mxu0 0.0
    %1195 = vmatpush1.msra.mxu0 0.0
    %1196 = vmatprep.subr.mxu0 0.0
    %1197 = vmatpush1.msra.mxu0 0.0
    %1198 = vmatprep.subr.mxu0 0.0
    %1199 = vmatpush1.msra.mxu0 0.0
    %1200 = vmatprep.subr.mxu0 0.0
    %1201 = vmatpush1.msra.mxu0 0.0
    %1202 = vmatprep.subr.mxu0 0.0
    %1203 = vmatpush1.msra.mxu0 0.0
    %1204 = vmatprep.mubr.f32.mxu0 0.0
    %1205 = vmatmul.mubr.f32.gmra.mrb[0].mxu0 %v1138
    %v1206 = vpop.f32.mrb[0].mxu0
    %v1207 = vadd.f32 0.0, %v1206
    %v1208 = vpop.f32.mrb[0].mxu0
    %1209 = vdwg.mxu0
    %v1210 = vadd.f32 %v1135, %v1207
    %v1211 = vmul.f32 %v878, %v911
    %v1213 = vsel %vm914, %v1211, 0
    %1215 = vmatprep.subr.mxu0 0.0
    %1216 = vmatpush1.msra.mxu0 %v804
    %1217 = vmatprep.subr.mxu0 0.0
    %1218 = vmatpush1.msra.mxu0 %v805
    %1219 = vmatprep.subr.mxu0 0.0
    %1220 = vmatpush1.msra.mxu0 %v806
    %1221 = vmatprep.subr.mxu0 0.0
    %1222 = vmatpush1.msra.mxu0 %v807
    %1223 = vmatprep.subr.mxu0 0.0
    %1224 = vmatpush1.msra.mxu0 0.0
    %1225 = vmatprep.subr.mxu0 0.0
    %1226 = vmatpush1.msra.mxu0 0.0
    %1227 = vmatprep.subr.mxu0 0.0
    %1228 = vmatpush1.msra.mxu0 0.0
    %1229 = vmatprep.subr.mxu0 0.0
    %1230 = vmatpush1.msra.mxu0 0.0
    %1231 = vmatprep.subr.mxu0 0.0
    %1232 = vmatpush1.msra.mxu0 0.0
    %1233 = vmatprep.subr.mxu0 0.0
    %1234 = vmatpush1.msra.mxu0 0.0
    %1235 = vmatprep.subr.mxu0 0.0
    %1236 = vmatpush1.msra.mxu0 0.0
    %1237 = vmatprep.subr.mxu0 0.0
    %1238 = vmatpush1.msra.mxu0 0.0
    %1239 = vmatprep.subr.mxu0 0.0
    %1240 = vmatpush1.msra.mxu0 0.0
    %1241 = vmatprep.subr.mxu0 0.0
    %1242 = vmatpush1.msra.mxu0 0.0
    %1243 = vmatprep.subr.mxu0 0.0
    %1244 = vmatpush1.msra.mxu0 0.0
    %1245 = vmatprep.subr.mxu0 0.0
    %1246 = vmatpush1.msra.mxu0 0.0
    %1247 = vmatprep.subr.mxu0 0.0
    %1248 = vmatpush1.msra.mxu0 0.0
    %1249 = vmatprep.subr.mxu0 0.0
    %1250 = vmatpush1.msra.mxu0 0.0
    %1251 = vmatprep.subr.mxu0 0.0
    %1252 = vmatpush1.msra.mxu0 0.0
    %1253 = vmatprep.subr.mxu0 0.0
    %1254 = vmatpush1.msra.mxu0 0.0
    %1255 = vmatprep.subr.mxu0 0.0
    %1256 = vmatpush1.msra.mxu0 0.0
    %1257 = vmatprep.subr.mxu0 0.0
    %1258 = vmatpush1.msra.mxu0 0.0
    %1259 = vmatprep.subr.mxu0 0.0
    %1260 = vmatpush1.msra.mxu0 0.0
    %1261 = vmatprep.subr.mxu0 0.0
    %1262 = vmatpush1.msra.mxu0 0.0
    %1263 = vmatprep.subr.mxu0 0.0
    %1264 = vmatpush1.msra.mxu0 0.0
    %1265 = vmatprep.subr.mxu0 0.0
    %1266 = vmatpush1.msra.mxu0 0.0
    %1267 = vmatprep.subr.mxu0 0.0
    %1268 = vmatpush1.msra.mxu0 0.0
    %1269 = vmatprep.subr.mxu0 0.0
    %1270 = vmatpush1.msra.mxu0 0.0
    %1271 = vmatprep.subr.mxu0 0.0
    %1272 = vmatpush1.msra.mxu0 0.0
    %1273 = vmatprep.subr.mxu0 0.0
    %1274 = vmatpush1.msra.mxu0 0.0
    %1275 = vmatprep.subr.mxu0 0.0
    %1276 = vmatpush1.msra.mxu0 0.0
    %1277 = vmatprep.subr.mxu0 0.0
    %1278 = vmatpush1.msra.mxu0 0.0
    %1279 = vmatprep.mubr.f32.mxu0 0.0
    %1280 = vmatmul.mubr.f32.gmra.mrb[0].mxu0 %v1213
    %v1281 = vpop.f32.mrb[0].mxu0
    %v1282 = vadd.f32 0.0, %v1281
    %v1283 = vpop.f32.mrb[0].mxu0
    %1284 = vdwg.mxu0
    %v1285 = vadd.f32 %v1210, %v1282
    %v1286 = vmul.f32 %v888, %v911
    %v1288 = vsel %vm914, %v1286, 0
    %1290 = vmatprep.subr.mxu0 0.0
    %1291 = vmatpush1.msra.mxu0 %v808
    %1292 = vmatprep.subr.mxu0 0.0
    %1293 = vmatpush1.msra.mxu0 %v809
    %1294 = vmatprep.subr.mxu0 0.0
    %1295 = vmatpush1.msra.mxu0 %v810
    %1296 = vmatprep.subr.mxu0 0.0
    %1297 = vmatpush1.msra.mxu0 %v811
    %1298 = vmatprep.subr.mxu0 0.0
    %1299 = vmatpush1.msra.mxu0 0.0
    %1300 = vmatprep.subr.mxu0 0.0
    %1301 = vmatpush1.msra.mxu0 0.0
    %1302 = vmatprep.subr.mxu0 0.0
    %1303 = vmatpush1.msra.mxu0 0.0
    %1304 = vmatprep.subr.mxu0 0.0
    %1305 = vmatpush1.msra.mxu0 0.0
    %1306 = vmatprep.subr.mxu0 0.0
    %1307 = vmatpush1.msra.mxu0 0.0
    %1308 = vmatprep.subr.mxu0 0.0
    %1309 = vmatpush1.msra.mxu0 0.0
    %1310 = vmatprep.subr.mxu0 0.0
    %1311 = vmatpush1.msra.mxu0 0.0
    %1312 = vmatprep.subr.mxu0 0.0
    %1313 = vmatpush1.msra.mxu0 0.0
    %1314 = vmatprep.subr.mxu0 0.0
    %1315 = vmatpush1.msra.mxu0 0.0
    %1316 = vmatprep.subr.mxu0 0.0
    %1317 = vmatpush1.msra.mxu0 0.0
    %1318 = vmatprep.subr.mxu0 0.0
    %1319 = vmatpush1.msra.mxu0 0.0
    %1320 = vmatprep.subr.mxu0 0.0
    %1321 = vmatpush1.msra.mxu0 0.0
    %1322 = vmatprep.subr.mxu0 0.0
    %1323 = vmatpush1.msra.mxu0 0.0
    %1324 = vmatprep.subr.mxu0 0.0
    %1325 = vmatpush1.msra.mxu0 0.0
    %1326 = vmatprep.subr.mxu0 0.0
    %1327 = vmatpush1.msra.mxu0 0.0
    %1328 = vmatprep.subr.mxu0 0.0
    %1329 = vmatpush1.msra.mxu0 0.0
    %1330 = vmatprep.subr.mxu0 0.0
    %1331 = vmatpush1.msra.mxu0 0.0
    %1332 = vmatprep.subr.mxu0 0.0
    %1333 = vmatpush1.msra.mxu0 0.0
    %1334 = vmatprep.subr.mxu0 0.0
    %1335 = vmatpush1.msra.mxu0 0.0
    %1336 = vmatprep.subr.mxu0 0.0
    %1337 = vmatpush1.msra.mxu0 0.0
    %1338 = vmatprep.subr.mxu0 0.0
    %1339 = vmatpush1.msra.mxu0 0.0
    %1340 = vmatprep.subr.mxu0 0.0
    %1341 = vmatpush1.msra.mxu0 0.0
    %1342 = vmatprep.subr.mxu0 0.0
    %1343 = vmatpush1.msra.mxu0 0.0
    %1344 = vmatprep.subr.mxu0 0.0
    %1345 = vmatpush1.msra.mxu0 0.0
    %1346 = vmatprep.subr.mxu0 0.0
    %1347 = vmatpush1.msra.mxu0 0.0
    %1348 = vmatprep.subr.mxu0 0.0
    %1349 = vmatpush1.msra.mxu0 0.0
    %1350 = vmatprep.subr.mxu0 0.0
    %1351 = vmatpush1.msra.mxu0 0.0
    %1352 = vmatprep.subr.mxu0 0.0
    %1353 = vmatpush1.msra.mxu0 0.0
    %1354 = vmatprep.mubr.f32.mxu0 0.0
    %1355 = vmatmul.mubr.f32.gmra.mrb[0].mxu0 %v1288
    %v1356 = vpop.f32.mrb[0].mxu0
    %v1357 = vadd.f32 0.0, %v1356
    %v1358 = vpop.f32.mrb[0].mxu0
    %1359 = vdwg.mxu0
    %v1360 = vadd.f32 %v1285, %v1357
    %v1361 = vmul.f32 %v898, %v911
    %v1363 = vsel %vm914, %v1361, 0
    %1365 = vmatprep.subr.mxu0 0.0
    %1366 = vmatpush1.msra.mxu0 %v812
    %1367 = vmatprep.subr.mxu0 0.0
    %1368 = vmatpush1.msra.mxu0 %v813
    %1369 = vmatprep.subr.mxu0 0.0
    %1370 = vmatpush1.msra.mxu0 %v814
    %1371 = vmatprep.subr.mxu0 0.0
    %1372 = vmatpush1.msra.mxu0 %v815
    %1373 = vmatprep.subr.mxu0 0.0
    %1374 = vmatpush1.msra.mxu0 0.0
    %1375 = vmatprep.subr.mxu0 0.0
    %1376 = vmatpush1.msra.mxu0 0.0
    %1377 = vmatprep.subr.mxu0 0.0
    %1378 = vmatpush1.msra.mxu0 0.0
    %1379 = vmatprep.subr.mxu0 0.0
    %1380 = vmatpush1.msra.mxu0 0.0
    %1381 = vmatprep.subr.mxu0 0.0
    %1382 = vmatpush1.msra.mxu0 0.0
    %1383 = vmatprep.subr.mxu0 0.0
    %1384 = vmatpush1.msra.mxu0 0.0
    %1385 = vmatprep.subr.mxu0 0.0
    %1386 = vmatpush1.msra.mxu0 0.0
    %1387 = vmatprep.subr.mxu0 0.0
    %1388 = vmatpush1.msra.mxu0 0.0
    %1389 = vmatprep.subr.mxu0 0.0
    %1390 = vmatpush1.msra.mxu0 0.0
    %1391 = vmatprep.subr.mxu0 0.0
    %1392 = vmatpush1.msra.mxu0 0.0
    %1393 = vmatprep.subr.mxu0 0.0
    %1394 = vmatpush1.msra.mxu0 0.0
    %1395 = vmatprep.subr.mxu0 0.0
    %1396 = vmatpush1.msra.mxu0 0.0
    %1397 = vmatprep.subr.mxu0 0.0
    %1398 = vmatpush1.msra.mxu0 0.0
    %1399 = vmatprep.subr.mxu0 0.0
    %1400 = vmatpush1.msra.mxu0 0.0
    %1401 = vmatprep.subr.mxu0 0.0
    %1402 = vmatpush1.msra.mxu0 0.0
    %1403 = vmatprep.subr.mxu0 0.0
    %1404 = vmatpush1.msra.mxu0 0.0
    %1405 = vmatprep.subr.mxu0 0.0
    %1406 = vmatpush1.msra.mxu0 0.0
    %1407 = vmatprep.subr.mxu0 0.0
    %1408 = vmatpush1.msra.mxu0 0.0
    %1409 = vmatprep.subr.mxu0 0.0
    %1410 = vmatpush1.msra.mxu0 0.0
    %1411 = vmatprep.subr.mxu0 0.0
    %1412 = vmatpush1.msra.mxu0 0.0
    %1413 = vmatprep.subr.mxu0 0.0
    %1414 = vmatpush1.msra.mxu0 0.0
    %1415 = vmatprep.subr.mxu0 0.0
    %1416 = vmatpush1.msra.mxu0 0.0
    %1417 = vmatprep.subr.mxu0 0.0
    %1418 = vmatpush1.msra.mxu0 0.0
    %1419 = vmatprep.subr.mxu0 0.0
    %1420 = vmatpush1.msra.mxu0 0.0
    %1421 = vmatprep.subr.mxu0 0.0
    %1422 = vmatpush1.msra.mxu0 0.0
    %1423 = vmatprep.subr.mxu0 0.0
    %1424 = vmatpush1.msra.mxu0 0.0
    %1425 = vmatprep.subr.mxu0 0.0
    %1426 = vmatpush1.msra.mxu0 0.0
    %1427 = vmatprep.subr.mxu0 0.0
    %1428 = vmatpush1.msra.mxu0 0.0
    %1429 = vmatprep.mubr.f32.mxu0 0.0
    %1430 = vmatmul.mubr.f32.gmra.mrb[0].mxu0 %v1363
    %v1431 = vpop.f32.mrb[0].mxu0
    %v1432 = vadd.f32 0.0, %v1431
    %v1433 = vpop.f32.mrb[0].mxu0
    %1434 = vdwg.mxu0
    %v1435 = vadd.f32 %v1360, %v1432
    %v1436 = vmul.f32 %v908, %v911
    %v1438 = vsel %vm914, %v1436, 0
    %1440 = vmatprep.subr.mxu0 0.0
    %1441 = vmatpush1.msra.mxu0 %v816
    %1442 = vmatprep.subr.mxu0 0.0
    %1443 = vmatpush1.msra.mxu0 %v817
    %1444 = vmatprep.subr.mxu0 0.0
    %1445 = vmatpush1.msra.mxu0 %v818
    %1446 = vmatprep.subr.mxu0 0.0
    %1447 = vmatpush1.msra.mxu0 %v819
    %1448 = vmatprep.subr.mxu0 0.0
    %1449 = vmatpush1.msra.mxu0 0.0
    %1450 = vmatprep.subr.mxu0 0.0
    %1451 = vmatpush1.msra.mxu0 0.0
    %1452 = vmatprep.subr.mxu0 0.0
    %1453 = vmatpush1.msra.mxu0 0.0
    %1454 = vmatprep.subr.mxu0 0.0
    %1455 = vmatpush1.msra.mxu0 0.0
    %1456 = vmatprep.subr.mxu0 0.0
    %1457 = vmatpush1.msra.mxu0 0.0
    %1458 = vmatprep.subr.mxu0 0.0
    %1459 = vmatpush1.msra.mxu0 0.0
    %1460 = vmatprep.subr.mxu0 0.0
    %1461 = vmatpush1.msra.mxu0 0.0
    %1462 = vmatprep.subr.mxu0 0.0
    %1463 = vmatpush1.msra.mxu0 0.0
    %1464 = vmatprep.subr.mxu0 0.0
    %1465 = vmatpush1.msra.mxu0 0.0
    %1466 = vmatprep.subr.mxu0 0.0
    %1467 = vmatpush1.msra.mxu0 0.0
    %1468 = vmatprep.subr.mxu0 0.0
    %1469 = vmatpush1.msra.mxu0 0.0
    %1470 = vmatprep.subr.mxu0 0.0
    %1471 = vmatpush1.msra.mxu0 0.0
    %1472 = vmatprep.subr.mxu0 0.0
    %1473 = vmatpush1.msra.mxu0 0.0
    %1474 = vmatprep.subr.mxu0 0.0
    %1475 = vmatpush1.msra.mxu0 0.0
    %1476 = vmatprep.subr.mxu0 0.0
    %1477 = vmatpush1.msra.mxu0 0.0
    %1478 = vmatprep.subr.mxu0 0.0
    %1479 = vmatpush1.msra.mxu0 0.0
    %1480 = vmatprep.subr.mxu0 0.0
    %1481 = vmatpush1.msra.mxu0 0.0
    %1482 = vmatprep.subr.mxu0 0.0
    %1483 = vmatpush1.msra.mxu0 0.0
    %1484 = vmatprep.subr.mxu0 0.0
    %1485 = vmatpush1.msra.mxu0 0.0
    %1486 = vmatprep.subr.mxu0 0.0
    %1487 = vmatpush1.msra.mxu0 0.0
    %1488 = vmatprep.subr.mxu0 0.0
    %1489 = vmatpush1.msra.mxu0 0.0
    %1490 = vmatprep.subr.mxu0 0.0
    %1491 = vmatpush1.msra.mxu0 0.0
    %1492 = vmatprep.subr.mxu0 0.0
    %1493 = vmatpush1.msra.mxu0 0.0
    %1494 = vmatprep.subr.mxu0 0.0
    %1495 = vmatpush1.msra.mxu0 0.0
    %1496 = vmatprep.subr.mxu0 0.0
    %1497 = vmatpush1.msra.mxu0 0.0
    %1498 = vmatprep.subr.mxu0 0.0
    %1499 = vmatpush1.msra.mxu0 0.0
    %1500 = vmatprep.subr.mxu0 0.0
    %1501 = vmatpush1.msra.mxu0 0.0
    %1502 = vmatprep.subr.mxu0 0.0
    %1503 = vmatpush1.msra.mxu0 0.0
    %1504 = vmatprep.mubr.f32.mxu0 0.0
    %1505 = vmatmul.mubr.f32.gmra.mrb[0].mxu0 %v1438
    %v1506 = vpop.f32.mrb[0].mxu0
    %v1507 = vadd.f32 0.0, %v1506
    %v1508 = vpop.f32.mrb[0].mxu0
    %1509 = vdwg.mxu0
    %v1510 = vadd.f32 %v1435, %v1507
    %v1512 = vlaneseq
    %v1513 = vshrl.u32 %v1512, 7
    %v1514 = vsub.s32 0, %v1513
    %v1515 = vrot.slane %v821, %v1514
    %v1517 = vadd.f32 %v1510, %v1515
    %v1518 = vld [vmem:[%s10] sm:$0xff]
    %v1519 = vld [vmem:[%s10 + $0x8] sm:$0xff]
    %v1520 = vld [vmem:[%s10 + $0x10] sm:$0xff]
    %v1521 = vld [vmem:[%s10 + $0x18] sm:$0xff]
    %v1522 = vld [vmem:[%s10 + $0x20] sm:$0xff]
    %v1523 = vld [vmem:[%s10 + $0x28] sm:$0xff]
    %v1524 = vld [vmem:[%s10 + $0x30] sm:$0xff]
    %v1525 = vld [vmem:[%s10 + $0x38] sm:$0xff]
    %v1526 = vld [vmem:[%s10 + $0x40] sm:$0xff]
    %v1527 = vld [vmem:[%s10 + $0x48] sm:$0xff]
    %v1528 = vld [vmem:[%s10 + $0x50] sm:$0xff]
    %v1529 = vld [vmem:[%s10 + $0x58] sm:$0xff]
    %v1530 = vld [vmem:[%s10 + $0x60] sm:$0xff]
    %v1531 = vld [vmem:[%s10 + $0x68] sm:$0xff]
    %v1532 = vld [vmem:[%s10 + $0x70] sm:$0xff]
    %v1533 = vld [vmem:[%s10 + $0x78] sm:$0xff]
    %v1534 = vld [vmem:[%s11] sm:$0x1]
    %v1535 = vld [vmem:[%s12] sm:$0x1]
    %v1537 = vlaneseq
    %v1538 = vshrl.u32 %v1537, 7
    %v1539 = vsub.s32 0, %v1538
    %v1540 = vrot.slane %v1534, %v1539
    %v1542 = vmul.f32 %v1517, %v1540
    %v1543 = vtanh.pop %v1542
    %s1544 = sld [smem:[#allocation7]]
    %v1545 = vstv %s1544
    %v1546 = vsub.f32 %v1543, %v1545
    %v1547 = vand.u32 2147483647, %v1546
    %v1548 = vmul.f32 %v1547, %v1547
    %v1549 = vmul.f32 %v1548, %v1547
    %v1550 = vsub.f32 0.0, %v1549
    %v1551 = vmul.f32 %v1550, 1.442695
    %v1552 = vpow.pop %v1551
    %v1553 = vadd.f32 %v1552, 0.0
    %s1554 = sld [smem:[#allocation7 + $0x1]]
    %v1555 = vstv %s1554
    %v1556 = vsub.f32 %v1543, %v1555
    %v1557 = vand.u32 2147483647, %v1556
    %v1558 = vmul.f32 %v1557, %v1557
    %v1559 = vmul.f32 %v1558, %v1557
    %v1560 = vsub.f32 0.0, %v1559
    %v1561 = vmul.f32 %v1560, 1.442695
    %v1562 = vpow.pop %v1561
    %v1563 = vadd.f32 %v1553, %v1562
    %s1564 = sld [smem:[#allocation7 + $0x2]]
    %v1565 = vstv %s1564
    %v1566 = vsub.f32 %v1543, %v1565
    %v1567 = vand.u32 2147483647, %v1566
    %v1568 = vmul.f32 %v1567, %v1567
    %v1569 = vmul.f32 %v1568, %v1567
    %v1570 = vsub.f32 0.0, %v1569
    %v1571 = vmul.f32 %v1570, 1.442695
    %v1572 = vpow.pop %v1571
    %v1573 = vadd.f32 %v1563, %v1572
    %s1574 = sld [smem:[#allocation7 + $0x3]]
    %v1575 = vstv %s1574
    %v1576 = vsub.f32 %v1543, %v1575
    %v1577 = vand.u32 2147483647, %v1576
    %v1578 = vmul.f32 %v1577, %v1577
    %v1579 = vmul.f32 %v1578, %v1577
    %v1580 = vsub.f32 0.0, %v1579
    %v1581 = vmul.f32 %v1580, 1.442695
    %v1582 = vpow.pop %v1581
    %v1583 = vadd.f32 %v1573, %v1582
    %s1584 = sld [smem:[#allocation7 + $0x4]]
    %v1585 = vstv %s1584
    %v1586 = vsub.f32 %v1543, %v1585
    %v1587 = vand.u32 2147483647, %v1586
    %v1588 = vmul.f32 %v1587, %v1587
    %v1589 = vmul.f32 %v1588, %v1587
    %v1590 = vsub.f32 0.0, %v1589
    %v1591 = vmul.f32 %v1590, 1.442695
    %v1592 = vpow.pop %v1591
    %v1593 = vadd.f32 %v1583, %v1592
    %s1594 = sld [smem:[#allocation7 + $0x5]]
    %v1595 = vstv %s1594
    %v1596 = vsub.f32 %v1543, %v1595
    %v1597 = vand.u32 2147483647, %v1596
    %v1598 = vmul.f32 %v1597, %v1597
    %v1599 = vmul.f32 %v1598, %v1597
    %v1600 = vsub.f32 0.0, %v1599
    %v1601 = vmul.f32 %v1600, 1.442695
    %v1602 = vpow.pop %v1601
    %v1603 = vadd.f32 %v1593, %v1602
    %s1604 = sld [smem:[#allocation7 + $0x6]]
    %v1605 = vstv %s1604
    %v1606 = vsub.f32 %v1543, %v1605
    %v1607 = vand.u32 2147483647, %v1606
    %v1608 = vmul.f32 %v1607, %v1607
    %v1609 = vmul.f32 %v1608, %v1607
    %v1610 = vsub.f32 0.0, %v1609
    %v1611 = vmul.f32 %v1610, 1.442695
    %v1612 = vpow.pop %v1611
    %v1613 = vadd.f32 %v1603, %v1612
    %s1614 = sld [smem:[#allocation7 + $0x7]]
    %v1615 = vstv %s1614
    %v1616 = vsub.f32 %v1543, %v1615
    %v1617 = vand.u32 2147483647, %v1616
    %v1618 = vmul.f32 %v1617, %v1617
    %v1619 = vmul.f32 %v1618, %v1617
    %v1620 = vsub.f32 0.0, %v1619
    %v1621 = vmul.f32 %v1620, 1.442695
    %v1622 = vpow.pop %v1621
    %v1623 = vadd.f32 %v1613, %v1622
    %v1624 = vadd.f32 %v1623, 1e-08
    %v1625 = vrcp.pop %v1624
    %v1626 = vmul.f32 %v1552, %v1625
    %v1627 = vmul.f32 %v1562, %v1625
    %vm1628 = vcmask 130048
    %v1630 = vsel %vm1628, %v1627, 0
    %1632 = vmatprep.subr.mxu0 0.0
    %1633 = vmatpush1.msra.mxu0 %v1520
    %1634 = vmatprep.subr.mxu0 0.0
    %1635 = vmatpush1.msra.mxu0 %v1521
    %1636 = vmatprep.subr.mxu0 0.0
    %1637 = vmatpush1.msra.mxu0 0.0
    %1638 = vmatprep.subr.mxu0 0.0
    %1639 = vmatpush1.msra.mxu0 0.0
    %1640 = vmatprep.subr.mxu0 0.0
    %1641 = vmatpush1.msra.mxu0 0.0
    %1642 = vmatprep.subr.mxu0 0.0
    %1643 = vmatpush1.msra.mxu0 0.0
    %1644 = vmatprep.subr.mxu0 0.0
    %1645 = vmatpush1.msra.mxu0 0.0
    %1646 = vmatprep.subr.mxu0 0.0
    %1647 = vmatpush1.msra.mxu0 0.0
    %1648 = vmatprep.subr.mxu0 0.0
    %1649 = vmatpush1.msra.mxu0 0.0
    %1650 = vmatprep.subr.mxu0 0.0
    %1651 = vmatpush1.msra.mxu0 0.0
    %1652 = vmatprep.subr.mxu0 0.0
    %1653 = vmatpush1.msra.mxu0 0.0
    %1654 = vmatprep.subr.mxu0 0.0
    %1655 = vmatpush1.msra.mxu0 0.0
    %1656 = vmatprep.subr.mxu0 0.0
    %1657 = vmatpush1.msra.mxu0 0.0
    %1658 = vmatprep.subr.mxu0 0.0
    %1659 = vmatpush1.msra.mxu0 0.0
    %1660 = vmatprep.subr.mxu0 0.0
    %1661 = vmatpush1.msra.mxu0 0.0
    %1662 = vmatprep.subr.mxu0 0.0
    %1663 = vmatpush1.msra.mxu0 0.0
    %1664 = vmatprep.subr.mxu0 0.0
    %1665 = vmatpush1.msra.mxu0 0.0
    %1666 = vmatprep.subr.mxu0 0.0
    %1667 = vmatpush1.msra.mxu0 0.0
    %1668 = vmatprep.subr.mxu0 0.0
    %1669 = vmatpush1.msra.mxu0 0.0
    %1670 = vmatprep.subr.mxu0 0.0
    %1671 = vmatpush1.msra.mxu0 0.0
    %1672 = vmatprep.subr.mxu0 0.0
    %1673 = vmatpush1.msra.mxu0 0.0
    %1674 = vmatprep.subr.mxu0 0.0
    %1675 = vmatpush1.msra.mxu0 0.0
    %1676 = vmatprep.subr.mxu0 0.0
    %1677 = vmatpush1.msra.mxu0 0.0
    %1678 = vmatprep.subr.mxu0 0.0
    %1679 = vmatpush1.msra.mxu0 0.0
    %1680 = vmatprep.subr.mxu0 0.0
    %1681 = vmatpush1.msra.mxu0 0.0
    %1682 = vmatprep.subr.mxu0 0.0
    %1683 = vmatpush1.msra.mxu0 0.0
    %1684 = vmatprep.subr.mxu0 0.0
    %1685 = vmatpush1.msra.mxu0 0.0
    %1686 = vmatprep.subr.mxu0 0.0
    %1687 = vmatpush1.msra.mxu0 0.0
    %1688 = vmatprep.subr.mxu0 0.0
    %1689 = vmatpush1.msra.mxu0 0.0
    %1690 = vmatprep.subr.mxu0 0.0
    %1691 = vmatpush1.msra.mxu0 0.0
    %1692 = vmatprep.subr.mxu0 0.0
    %1693 = vmatpush1.msra.mxu0 0.0
    %1694 = vmatprep.subr.mxu0 0.0
    %1695 = vmatpush1.msra.mxu0 0.0
    %1696 = vmatprep.mubr.f32.mxu0 0.0
    %1697 = vmatmul.mubr.f32.gmra.mrb[0].mxu0 %v1630
    %v1698 = vpop.f32.mrb[0].mxu0
    %v1699 = vadd.f32 0.0, %v1698
    %v1700 = vpop.f32.mrb[0].mxu0
    %1701 = vdwg.mxu0
    %v1703 = vsel %vm1628, %v1626, 0
    %1705 = vmatprep.subr.mxu0 0.0
    %1706 = vmatpush1.msra.mxu0 %v1518
    %1707 = vmatprep.subr.mxu0 0.0
    %1708 = vmatpush1.msra.mxu0 %v1519
    %1709 = vmatprep.subr.mxu0 0.0
    %1710 = vmatpush1.msra.mxu0 0.0
    %1711 = vmatprep.subr.mxu0 0.0
    %1712 = vmatpush1.msra.mxu0 0.0
    %1713 = vmatprep.subr.mxu0 0.0
    %1714 = vmatpush1.msra.mxu0 0.0
    %1715 = vmatprep.subr.mxu0 0.0
    %1716 = vmatpush1.msra.mxu0 0.0
    %1717 = vmatprep.subr.mxu0 0.0
    %1718 = vmatpush1.msra.mxu0 0.0
    %1719 = vmatprep.subr.mxu0 0.0
    %1720 = vmatpush1.msra.mxu0 0.0
    %1721 = vmatprep.subr.mxu0 0.0
    %1722 = vmatpush1.msra.mxu0 0.0
    %1723 = vmatprep.subr.mxu0 0.0
    %1724 = vmatpush1.msra.mxu0 0.0
    %1725 = vmatprep.subr.mxu0 0.0
    %1726 = vmatpush1.msra.mxu0 0.0
    %1727 = vmatprep.subr.mxu0 0.0
    %1728 = vmatpush1.msra.mxu0 0.0
    %1729 = vmatprep.subr.mxu0 0.0
    %1730 = vmatpush1.msra.mxu0 0.0
    %1731 = vmatprep.subr.mxu0 0.0
    %1732 = vmatpush1.msra.mxu0 0.0
    %1733 = vmatprep.subr.mxu0 0.0
    %1734 = vmatpush1.msra.mxu0 0.0
    %1735 = vmatprep.subr.mxu0 0.0
    %1736 = vmatpush1.msra.mxu0 0.0
    %1737 = vmatprep.subr.mxu0 0.0
    %1738 = vmatpush1.msra.mxu0 0.0
    %1739 = vmatprep.subr.mxu0 0.0
    %1740 = vmatpush1.msra.mxu0 0.0
    %1741 = vmatprep.subr.mxu0 0.0
    %1742 = vmatpush1.msra.mxu0 0.0
    %1743 = vmatprep.subr.mxu0 0.0
    %1744 = vmatpush1.msra.mxu0 0.0
    %1745 = vmatprep.subr.mxu0 0.0
    %1746 = vmatpush1.msra.mxu0 0.0
    %1747 = vmatprep.subr.mxu0 0.0
    %1748 = vmatpush1.msra.mxu0 0.0
    %1749 = vmatprep.subr.mxu0 0.0
    %1750 = vmatpush1.msra.mxu0 0.0
    %1751 = vmatprep.subr.mxu0 0.0
    %1752 = vmatpush1.msra.mxu0 0.0
    %1753 = vmatprep.subr.mxu0 0.0
    %1754 = vmatpush1.msra.mxu0 0.0
    %1755 = vmatprep.subr.mxu0 0.0
    %1756 = vmatpush1.msra.mxu0 0.0
    %1757 = vmatprep.subr.mxu0 0.0
    %1758 = vmatpush1.msra.mxu0 0.0
    %1759 = vmatprep.subr.mxu0 0.0
    %1760 = vmatpush1.msra.mxu0 0.0
    %1761 = vmatprep.subr.mxu0 0.0
    %1762 = vmatpush1.msra.mxu0 0.0
    %1763 = vmatprep.subr.mxu0 0.0
    %1764 = vmatpush1.msra.mxu0 0.0
    %1765 = vmatprep.subr.mxu0 0.0
    %1766 = vmatpush1.msra.mxu0 0.0
    %1767 = vmatprep.subr.mxu0 0.0
    %1768 = vmatpush1.msra.mxu0 0.0
    %1769 = vmatprep.mubr.f32.mxu0 0.0
    %1770 = vmatmul.mubr.f32.gmra.mrb[0].mxu0 %v1703
    %v1771 = vpop.f32.mrb[0].mxu0
    %v1772 = vadd.f32 %v1699, %v1771
    %v1773 = vpop.f32.mrb[0].mxu0
    %1774 = vdwg.mxu0
    %v1775 = vmul.f32 %v1572, %v1625
    %v1777 = vsel %vm1628, %v1775, 0
    %1779 = vmatprep.subr.mxu0 0.0
    %1780 = vmatpush1.msra.mxu0 %v1522
    %1781 = vmatprep.subr.mxu0 0.0
    %1782 = vmatpush1.msra.mxu0 %v1523
    %1783 = vmatprep.subr.mxu0 0.0
    %1784 = vmatpush1.msra.mxu0 0.0
    %1785 = vmatprep.subr.mxu0 0.0
    %1786 = vmatpush1.msra.mxu0 0.0
    %1787 = vmatprep.subr.mxu0 0.0
    %1788 = vmatpush1.msra.mxu0 0.0
    %1789 = vmatprep.subr.mxu0 0.0
    %1790 = vmatpush1.msra.mxu0 0.0
    %1791 = vmatprep.subr.mxu0 0.0
    %1792 = vmatpush1.msra.mxu0 0.0
    %1793 = vmatprep.subr.mxu0 0.0
    %1794 = vmatpush1.msra.mxu0 0.0
    %1795 = vmatprep.subr.mxu0 0.0
    %1796 = vmatpush1.msra.mxu0 0.0
    %1797 = vmatprep.subr.mxu0 0.0
    %1798 = vmatpush1.msra.mxu0 0.0
    %1799 = vmatprep.subr.mxu0 0.0
    %1800 = vmatpush1.msra.mxu0 0.0
    %1801 = vmatprep.subr.mxu0 0.0
    %1802 = vmatpush1.msra.mxu0 0.0
    %1803 = vmatprep.subr.mxu0 0.0
    %1804 = vmatpush1.msra.mxu0 0.0
    %1805 = vmatprep.subr.mxu0 0.0
    %1806 = vmatpush1.msra.mxu0 0.0
    %1807 = vmatprep.subr.mxu0 0.0
    %1808 = vmatpush1.msra.mxu0 0.0
    %1809 = vmatprep.subr.mxu0 0.0
    %1810 = vmatpush1.msra.mxu0 0.0
    %1811 = vmatprep.subr.mxu0 0.0
    %1812 = vmatpush1.msra.mxu0 0.0
    %1813 = vmatprep.subr.mxu0 0.0
    %1814 = vmatpush1.msra.mxu0 0.0
    %1815 = vmatprep.subr.mxu0 0.0
    %1816 = vmatpush1.msra.mxu0 0.0
    %1817 = vmatprep.subr.mxu0 0.0
    %1818 = vmatpush1.msra.mxu0 0.0
    %1819 = vmatprep.subr.mxu0 0.0
    %1820 = vmatpush1.msra.mxu0 0.0
    %1821 = vmatprep.subr.mxu0 0.0
    %1822 = vmatpush1.msra.mxu0 0.0
    %1823 = vmatprep.subr.mxu0 0.0
    %1824 = vmatpush1.msra.mxu0 0.0
    %1825 = vmatprep.subr.mxu0 0.0
    %1826 = vmatpush1.msra.mxu0 0.0
    %1827 = vmatprep.subr.mxu0 0.0
    %1828 = vmatpush1.msra.mxu0 0.0
    %1829 = vmatprep.subr.mxu0 0.0
    %1830 = vmatpush1.msra.mxu0 0.0
    %1831 = vmatprep.subr.mxu0 0.0
    %1832 = vmatpush1.msra.mxu0 0.0
    %1833 = vmatprep.subr.mxu0 0.0
    %1834 = vmatpush1.msra.mxu0 0.0
    %1835 = vmatprep.subr.mxu0 0.0
    %1836 = vmatpush1.msra.mxu0 0.0
    %1837 = vmatprep.subr.mxu0 0.0
    %1838 = vmatpush1.msra.mxu0 0.0
    %1839 = vmatprep.subr.mxu0 0.0
    %1840 = vmatpush1.msra.mxu0 0.0
    %1841 = vmatprep.subr.mxu0 0.0
    %1842 = vmatpush1.msra.mxu0 0.0
    %1843 = vmatprep.mubr.f32.mxu0 0.0
    %1844 = vmatmul.mubr.f32.gmra.mrb[0].mxu0 %v1777
    %v1845 = vpop.f32.mrb[0].mxu0
    %v1846 = vadd.f32 0.0, %v1845
    %v1847 = vpop.f32.mrb[0].mxu0
    %1848 = vdwg.mxu0
    %v1849 = vadd.f32 %v1772, %v1846
    %v1850 = vmul.f32 %v1582, %v1625
    %v1852 = vsel %vm1628, %v1850, 0
    %1854 = vmatprep.subr.mxu0 0.0
    %1855 = vmatpush1.msra.mxu0 %v1524
    %1856 = vmatprep.subr.mxu0 0.0
    %1857 = vmatpush1.msra.mxu0 %v1525
    %1858 = vmatprep.subr.mxu0 0.0
    %1859 = vmatpush1.msra.mxu0 0.0
    %1860 = vmatprep.subr.mxu0 0.0
    %1861 = vmatpush1.msra.mxu0 0.0
    %1862 = vmatprep.subr.mxu0 0.0
    %1863 = vmatpush1.msra.mxu0 0.0
    %1864 = vmatprep.subr.mxu0 0.0
    %1865 = vmatpush1.msra.mxu0 0.0
    %1866 = vmatprep.subr.mxu0 0.0
    %1867 = vmatpush1.msra.mxu0 0.0
    %1868 = vmatprep.subr.mxu0 0.0
    %1869 = vmatpush1.msra.mxu0 0.0
    %1870 = vmatprep.subr.mxu0 0.0
    %1871 = vmatpush1.msra.mxu0 0.0
    %1872 = vmatprep.subr.mxu0 0.0
    %1873 = vmatpush1.msra.mxu0 0.0
    %1874 = vmatprep.subr.mxu0 0.0
    %1875 = vmatpush1.msra.mxu0 0.0
    %1876 = vmatprep.subr.mxu0 0.0
    %1877 = vmatpush1.msra.mxu0 0.0
    %1878 = vmatprep.subr.mxu0 0.0
    %1879 = vmatpush1.msra.mxu0 0.0
    %1880 = vmatprep.subr.mxu0 0.0
    %1881 = vmatpush1.msra.mxu0 0.0
    %1882 = vmatprep.subr.mxu0 0.0
    %1883 = vmatpush1.msra.mxu0 0.0
    %1884 = vmatprep.subr.mxu0 0.0
    %1885 = vmatpush1.msra.mxu0 0.0
    %1886 = vmatprep.subr.mxu0 0.0
    %1887 = vmatpush1.msra.mxu0 0.0
    %1888 = vmatprep.subr.mxu0 0.0
    %1889 = vmatpush1.msra.mxu0 0.0
    %1890 = vmatprep.subr.mxu0 0.0
    %1891 = vmatpush1.msra.mxu0 0.0
    %1892 = vmatprep.subr.mxu0 0.0
    %1893 = vmatpush1.msra.mxu0 0.0
    %1894 = vmatprep.subr.mxu0 0.0
    %1895 = vmatpush1.msra.mxu0 0.0
    %1896 = vmatprep.subr.mxu0 0.0
    %1897 = vmatpush1.msra.mxu0 0.0
    %1898 = vmatprep.subr.mxu0 0.0
    %1899 = vmatpush1.msra.mxu0 0.0
    %1900 = vmatprep.subr.mxu0 0.0
    %1901 = vmatpush1.msra.mxu0 0.0
    %1902 = vmatprep.subr.mxu0 0.0
    %1903 = vmatpush1.msra.mxu0 0.0
    %1904 = vmatprep.subr.mxu0 0.0
    %1905 = vmatpush1.msra.mxu0 0.0
    %1906 = vmatprep.subr.mxu0 0.0
    %1907 = vmatpush1.msra.mxu0 0.0
    %1908 = vmatprep.subr.mxu0 0.0
    %1909 = vmatpush1.msra.mxu0 0.0
    %1910 = vmatprep.subr.mxu0 0.0
    %1911 = vmatpush1.msra.mxu0 0.0
    %1912 = vmatprep.subr.mxu0 0.0
    %1913 = vmatpush1.msra.mxu0 0.0
    %1914 = vmatprep.subr.mxu0 0.0
    %1915 = vmatpush1.msra.mxu0 0.0
    %1916 = vmatprep.subr.mxu0 0.0
    %1917 = vmatpush1.msra.mxu0 0.0
    %1918 = vmatprep.mubr.f32.mxu0 0.0
    %1919 = vmatmul.mubr.f32.gmra.mrb[0].mxu0 %v1852
    %v1920 = vpop.f32.mrb[0].mxu0
    %v1921 = vadd.f32 0.0, %v1920
    %v1922 = vpop.f32.mrb[0].mxu0
    %1923 = vdwg.mxu0
    %v1924 = vadd.f32 %v1849, %v1921
    %v1925 = vmul.f32 %v1592, %v1625
    %v1927 = vsel %vm1628, %v1925, 0
    %1929 = vmatprep.subr.mxu0 0.0
    %1930 = vmatpush1.msra.mxu0 %v1526
    %1931 = vmatprep.subr.mxu0 0.0
    %1932 = vmatpush1.msra.mxu0 %v1527
    %1933 = vmatprep.subr.mxu0 0.0
    %1934 = vmatpush1.msra.mxu0 0.0
    %1935 = vmatprep.subr.mxu0 0.0
    %1936 = vmatpush1.msra.mxu0 0.0
    %1937 = vmatprep.subr.mxu0 0.0
    %1938 = vmatpush1.msra.mxu0 0.0
    %1939 = vmatprep.subr.mxu0 0.0
    %1940 = vmatpush1.msra.mxu0 0.0
    %1941 = vmatprep.subr.mxu0 0.0
    %1942 = vmatpush1.msra.mxu0 0.0
    %1943 = vmatprep.subr.mxu0 0.0
    %1944 = vmatpush1.msra.mxu0 0.0
    %1945 = vmatprep.subr.mxu0 0.0
    %1946 = vmatpush1.msra.mxu0 0.0
    %1947 = vmatprep.subr.mxu0 0.0
    %1948 = vmatpush1.msra.mxu0 0.0
    %1949 = vmatprep.subr.mxu0 0.0
    %1950 = vmatpush1.msra.mxu0 0.0
    %1951 = vmatprep.subr.mxu0 0.0
    %1952 = vmatpush1.msra.mxu0 0.0
    %1953 = vmatprep.subr.mxu0 0.0
    %1954 = vmatpush1.msra.mxu0 0.0
    %1955 = vmatprep.subr.mxu0 0.0
    %1956 = vmatpush1.msra.mxu0 0.0
    %1957 = vmatprep.subr.mxu0 0.0
    %1958 = vmatpush1.msra.mxu0 0.0
    %1959 = vmatprep.subr.mxu0 0.0
    %1960 = vmatpush1.msra.mxu0 0.0
    %1961 = vmatprep.subr.mxu0 0.0
    %1962 = vmatpush1.msra.mxu0 0.0
    %1963 = vmatprep.subr.mxu0 0.0
    %1964 = vmatpush1.msra.mxu0 0.0
    %1965 = vmatprep.subr.mxu0 0.0
    %1966 = vmatpush1.msra.mxu0 0.0
    %1967 = vmatprep.subr.mxu0 0.0
    %1968 = vmatpush1.msra.mxu0 0.0
    %1969 = vmatprep.subr.mxu0 0.0
    %1970 = vmatpush1.msra.mxu0 0.0
    %1971 = vmatprep.subr.mxu0 0.0
    %1972 = vmatpush1.msra.mxu0 0.0
    %1973 = vmatprep.subr.mxu0 0.0
    %1974 = vmatpush1.msra.mxu0 0.0
    %1975 = vmatprep.subr.mxu0 0.0
    %1976 = vmatpush1.msra.mxu0 0.0
    %1977 = vmatprep.subr.mxu0 0.0
    %1978 = vmatpush1.msra.mxu0 0.0
    %1979 = vmatprep.subr.mxu0 0.0
    %1980 = vmatpush1.msra.mxu0 0.0
    %1981 = vmatprep.subr.mxu0 0.0
    %1982 = vmatpush1.msra.mxu0 0.0
    %1983 = vmatprep.subr.mxu0 0.0
    %1984 = vmatpush1.msra.mxu0 0.0
    %1985 = vmatprep.subr.mxu0 0.0
    %1986 = vmatpush1.msra.mxu0 0.0
    %1987 = vmatprep.subr.mxu0 0.0
    %1988 = vmatpush1.msra.mxu0 0.0
    %1989 = vmatprep.subr.mxu0 0.0
    %1990 = vmatpush1.msra.mxu0 0.0
    %1991 = vmatprep.subr.mxu0 0.0
    %1992 = vmatpush1.msra.mxu0 0.0
    %1993 = vmatprep.mubr.f32.mxu0 0.0
    %1994 = vmatmul.mubr.f32.gmra.mrb[0].mxu0 %v1927
    %v1995 = vpop.f32.mrb[0].mxu0
    %v1996 = vadd.f32 0.0, %v1995
    %v1997 = vpop.f32.mrb[0].mxu0
    %1998 = vdwg.mxu0
    %v1999 = vadd.f32 %v1924, %v1996
    %v2000 = vmul.f32 %v1602, %v1625
    %v2002 = vsel %vm1628, %v2000, 0
    %2004 = vmatprep.subr.mxu0 0.0
    %2005 = vmatpush1.msra.mxu0 %v1528
    %2006 = vmatprep.subr.mxu0 0.0
    %2007 = vmatpush1.msra.mxu0 %v1529
    %2008 = vmatprep.subr.mxu0 0.0
    %2009 = vmatpush1.msra.mxu0 0.0
    %2010 = vmatprep.subr.mxu0 0.0
    %2011 = vmatpush1.msra.mxu0 0.0
    %2012 = vmatprep.subr.mxu0 0.0
    %2013 = vmatpush1.msra.mxu0 0.0
    %2014 = vmatprep.subr.mxu0 0.0
    %2015 = vmatpush1.msra.mxu0 0.0
    %2016 = vmatprep.subr.mxu0 0.0
    %2017 = vmatpush1.msra.mxu0 0.0
    %2018 = vmatprep.subr.mxu0 0.0
    %2019 = vmatpush1.msra.mxu0 0.0
    %2020 = vmatprep.subr.mxu0 0.0
    %2021 = vmatpush1.msra.mxu0 0.0
    %2022 = vmatprep.subr.mxu0 0.0
    %2023 = vmatpush1.msra.mxu0 0.0
    %2024 = vmatprep.subr.mxu0 0.0
    %2025 = vmatpush1.msra.mxu0 0.0
    %2026 = vmatprep.subr.mxu0 0.0
    %2027 = vmatpush1.msra.mxu0 0.0
    %2028 = vmatprep.subr.mxu0 0.0
    %2029 = vmatpush1.msra.mxu0 0.0
    %2030 = vmatprep.subr.mxu0 0.0
    %2031 = vmatpush1.msra.mxu0 0.0
    %2032 = vmatprep.subr.mxu0 0.0
    %2033 = vmatpush1.msra.mxu0 0.0
    %2034 = vmatprep.subr.mxu0 0.0
    %2035 = vmatpush1.msra.mxu0 0.0
    %2036 = vmatprep.subr.mxu0 0.0
    %2037 = vmatpush1.msra.mxu0 0.0
    %2038 = vmatprep.subr.mxu0 0.0
    %2039 = vmatpush1.msra.mxu0 0.0
    %2040 = vmatprep.subr.mxu0 0.0
    %2041 = vmatpush1.msra.mxu0 0.0
    %2042 = vmatprep.subr.mxu0 0.0
    %2043 = vmatpush1.msra.mxu0 0.0
    %2044 = vmatprep.subr.mxu0 0.0
    %2045 = vmatpush1.msra.mxu0 0.0
    %2046 = vmatprep.subr.mxu0 0.0
    %2047 = vmatpush1.msra.mxu0 0.0
    %2048 = vmatprep.subr.mxu0 0.0
    %2049 = vmatpush1.msra.mxu0 0.0
    %2050 = vmatprep.subr.mxu0 0.0
    %2051 = vmatpush1.msra.mxu0 0.0
    %2052 = vmatprep.subr.mxu0 0.0
    %2053 = vmatpush1.msra.mxu0 0.0
    %2054 = vmatprep.subr.mxu0 0.0
    %2055 = vmatpush1.msra.mxu0 0.0
    %2056 = vmatprep.subr.mxu0 0.0
    %2057 = vmatpush1.msra.mxu0 0.0
    %2058 = vmatprep.subr.mxu0 0.0
    %2059 = vmatpush1.msra.mxu0 0.0
    %2060 = vmatprep.subr.mxu0 0.0
    %2061 = vmatpush1.msra.mxu0 0.0
    %2062 = vmatprep.subr.mxu0 0.0
    %2063 = vmatpush1.msra.mxu0 0.0
    %2064 = vmatprep.subr.mxu0 0.0
    %2065 = vmatpush1.msra.mxu0 0.0
    %2066 = vmatprep.subr.mxu0 0.0
    %2067 = vmatpush1.msra.mxu0 0.0
    %2068 = vmatprep.mubr.f32.mxu0 0.0
    %2069 = vmatmul.mubr.f32.gmra.mrb[0].mxu0 %v2002
    %v2070 = vpop.f32.mrb[0].mxu0
    %v2071 = vadd.f32 0.0, %v2070
    %v2072 = vpop.f32.mrb[0].mxu0
    %2073 = vdwg.mxu0
    %v2074 = vadd.f32 %v1999, %v2071
    %v2075 = vmul.f32 %v1612, %v1625
    %v2077 = vsel %vm1628, %v2075, 0
    %2079 = vmatprep.subr.mxu0 0.0
    %2080 = vmatpush1.msra.mxu0 %v1530
    %2081 = vmatprep.subr.mxu0 0.0
    %2082 = vmatpush1.msra.mxu0 %v1531
    %2083 = vmatprep.subr.mxu0 0.0
    %2084 = vmatpush1.msra.mxu0 0.0
    %2085 = vmatprep.subr.mxu0 0.0
    %2086 = vmatpush1.msra.mxu0 0.0
    %2087 = vmatprep.subr.mxu0 0.0
    %2088 = vmatpush1.msra.mxu0 0.0
    %2089 = vmatprep.subr.mxu0 0.0
    %2090 = vmatpush1.msra.mxu0 0.0
    %2091 = vmatprep.subr.mxu0 0.0
    %2092 = vmatpush1.msra.mxu0 0.0
    %2093 = vmatprep.subr.mxu0 0.0
    %2094 = vmatpush1.msra.mxu0 0.0
    %2095 = vmatprep.subr.mxu0 0.0
    %2096 = vmatpush1.msra.mxu0 0.0
    %2097 = vmatprep.subr.mxu0 0.0
    %2098 = vmatpush1.msra.mxu0 0.0
    %2099 = vmatprep.subr.mxu0 0.0
    %2100 = vmatpush1.msra.mxu0 0.0
    %2101 = vmatprep.subr.mxu0 0.0
    %2102 = vmatpush1.msra.mxu0 0.0
    %2103 = vmatprep.subr.mxu0 0.0
    %2104 = vmatpush1.msra.mxu0 0.0
    %2105 = vmatprep.subr.mxu0 0.0
    %2106 = vmatpush1.msra.mxu0 0.0
    %2107 = vmatprep.subr.mxu0 0.0
    %2108 = vmatpush1.msra.mxu0 0.0
    %2109 = vmatprep.subr.mxu0 0.0
    %2110 = vmatpush1.msra.mxu0 0.0
    %2111 = vmatprep.subr.mxu0 0.0
    %2112 = vmatpush1.msra.mxu0 0.0
    %2113 = vmatprep.subr.mxu0 0.0
    %2114 = vmatpush1.msra.mxu0 0.0
    %2115 = vmatprep.subr.mxu0 0.0
    %2116 = vmatpush1.msra.mxu0 0.0
    %2117 = vmatprep.subr.mxu0 0.0
    %2118 = vmatpush1.msra.mxu0 0.0
    %2119 = vmatprep.subr.mxu0 0.0
    %2120 = vmatpush1.msra.mxu0 0.0
    %2121 = vmatprep.subr.mxu0 0.0
    %2122 = vmatpush1.msra.mxu0 0.0
    %2123 = vmatprep.subr.mxu0 0.0
    %2124 = vmatpush1.msra.mxu0 0.0
    %2125 = vmatprep.subr.mxu0 0.0
    %2126 = vmatpush1.msra.mxu0 0.0
    %2127 = vmatprep.subr.mxu0 0.0
    %2128 = vmatpush1.msra.mxu0 0.0
    %2129 = vmatprep.subr.mxu0 0.0
    %2130 = vmatpush1.msra.mxu0 0.0
    %2131 = vmatprep.subr.mxu0 0.0
    %2132 = vmatpush1.msra.mxu0 0.0
    %2133 = vmatprep.subr.mxu0 0.0
    %2134 = vmatpush1.msra.mxu0 0.0
    %2135 = vmatprep.subr.mxu0 0.0
    %2136 = vmatpush1.msra.mxu0 0.0
    %2137 = vmatprep.subr.mxu0 0.0
    %2138 = vmatpush1.msra.mxu0 0.0
    %2139 = vmatprep.subr.mxu0 0.0
    %2140 = vmatpush1.msra.mxu0 0.0
    %2141 = vmatprep.subr.mxu0 0.0
    %2142 = vmatpush1.msra.mxu0 0.0
    %2143 = vmatprep.mubr.f32.mxu0 0.0
    %2144 = vmatmul.mubr.f32.gmra.mrb[0].mxu0 %v2077
    %v2145 = vpop.f32.mrb[0].mxu0
    %v2146 = vadd.f32 0.0, %v2145
    %v2147 = vpop.f32.mrb[0].mxu0
    %2148 = vdwg.mxu0
    %v2149 = vadd.f32 %v2074, %v2146
    %v2150 = vmul.f32 %v1622, %v1625
    %v2152 = vsel %vm1628, %v2150, 0
    %2154 = vmatprep.subr.mxu0 0.0
    %2155 = vmatpush1.msra.mxu0 %v1532
    %2156 = vmatprep.subr.mxu0 0.0
    %2157 = vmatpush1.msra.mxu0 %v1533
    %2158 = vmatprep.subr.mxu0 0.0
    %2159 = vmatpush1.msra.mxu0 0.0
    %2160 = vmatprep.subr.mxu0 0.0
    %2161 = vmatpush1.msra.mxu0 0.0
    %2162 = vmatprep.subr.mxu0 0.0
    %2163 = vmatpush1.msra.mxu0 0.0
    %2164 = vmatprep.subr.mxu0 0.0
    %2165 = vmatpush1.msra.mxu0 0.0
    %2166 = vmatprep.subr.mxu0 0.0
    %2167 = vmatpush1.msra.mxu0 0.0
    %2168 = vmatprep.subr.mxu0 0.0
    %2169 = vmatpush1.msra.mxu0 0.0
    %2170 = vmatprep.subr.mxu0 0.0
    %2171 = vmatpush1.msra.mxu0 0.0
    %2172 = vmatprep.subr.mxu0 0.0
    %2173 = vmatpush1.msra.mxu0 0.0
    %2174 = vmatprep.subr.mxu0 0.0
    %2175 = vmatpush1.msra.mxu0 0.0
    %2176 = vmatprep.subr.mxu0 0.0
    %2177 = vmatpush1.msra.mxu0 0.0
    %2178 = vmatprep.subr.mxu0 0.0
    %2179 = vmatpush1.msra.mxu0 0.0
    %2180 = vmatprep.subr.mxu0 0.0
    %2181 = vmatpush1.msra.mxu0 0.0
    %2182 = vmatprep.subr.mxu0 0.0
    %2183 = vmatpush1.msra.mxu0 0.0
    %2184 = vmatprep.subr.mxu0 0.0
    %2185 = vmatpush1.msra.mxu0 0.0
    %2186 = vmatprep.subr.mxu0 0.0
    %2187 = vmatpush1.msra.mxu0 0.0
    %2188 = vmatprep.subr.mxu0 0.0
    %2189 = vmatpush1.msra.mxu0 0.0
    %2190 = vmatprep.subr.mxu0 0.0
    %2191 = vmatpush1.msra.mxu0 0.0
    %2192 = vmatprep.subr.mxu0 0.0
    %2193 = vmatpush1.msra.mxu0 0.0
    %2194 = vmatprep.subr.mxu0 0.0
    %2195 = vmatpush1.msra.mxu0 0.0
    %2196 = vmatprep.subr.mxu0 0.0
    %2197 = vmatpush1.msra.mxu0 0.0
    %2198 = vmatprep.subr.mxu0 0.0
    %2199 = vmatpush1.msra.mxu0 0.0
    %2200 = vmatprep.subr.mxu0 0.0
    %2201 = vmatpush1.msra.mxu0 0.0
    %2202 = vmatprep.subr.mxu0 0.0
    %2203 = vmatpush1.msra.mxu0 0.0
    %2204 = vmatprep.subr.mxu0 0.0
    %2205 = vmatpush1.msra.mxu0 0.0
    %2206 = vmatprep.subr.mxu0 0.0
    %2207 = vmatpush1.msra.mxu0 0.0
    %2208 = vmatprep.subr.mxu0 0.0
    %2209 = vmatpush1.msra.mxu0 0.0
    %2210 = vmatprep.subr.mxu0 0.0
    %2211 = vmatpush1.msra.mxu0 0.0
    %2212 = vmatprep.subr.mxu0 0.0
    %2213 = vmatpush1.msra.mxu0 0.0
    %2214 = vmatprep.subr.mxu0 0.0
    %2215 = vmatpush1.msra.mxu0 0.0
    %2216 = vmatprep.subr.mxu0 0.0
    %2217 = vmatpush1.msra.mxu0 0.0
    %2218 = vmatprep.mubr.f32.mxu0 0.0
    %2219 = vmatmul.mubr.f32.gmra.mrb[0].mxu0 %v2152
    %v2220 = vpop.f32.mrb[0].mxu0
    %v2221 = vadd.f32 0.0, %v2220
    %v2222 = vpop.f32.mrb[0].mxu0
    %2223 = vdwg.mxu0
    %v2224 = vadd.f32 %v2149, %v2221
    %v2226 = vlaneseq
    %v2227 = vshrl.u32 %v2226, 7
    %v2228 = vsub.s32 0, %v2227
    %v2229 = vrot.slane %v1535, %v2228
    %v2231 = vadd.f32 %v2224, %v2229
    %vm2232 = vcmask 25600
    %2233 = vst.msk [vmem:[#allocation8] sm:$0x3] %vm2232, %v2231
    // Predicated region
    $region66: #{tpu_custom_call.1} parent=1 // pred_check
      _
    $region67: #{tpu_custom_call.1} parent=1 // pred_check_branch
      %2235 = sbr.rel (0) target = $region69
    $region68: #{tpu_custom_call.1} parent=1 // pred_region
      %s2237 = ssub.s32 32, 32
      %2238 = vsyncadd [#allocation3], %s2237
      %s2240 = sshll.u32 [#allocation8], 4
      %s2241 = int_to_ptr.vmem [resolvable:$true] %s2240
      %2243 = dma.vmem_to_hbm [thread:$0]  %s2241, 32, %s13, [#allocation3]
    $region69: #{tpu_custom_call.1} parent=1 // pred_fallthru
      _
    // Predicated region
    $region70: #{tpu_custom_call.1} parent=1 // pred_check
      _
    $region71: #{tpu_custom_call.1} parent=1 // pred_check_branch
      %2245 = sbr.rel (0) target = $region73
    $region72: #{tpu_custom_call.1} parent=1 // pred_region
      %2246 = dma.done [#allocation3], 32
    $region73: #{tpu_custom_call.1} parent=1 // pred_fallthru
      _
    %2247 = vsyncpa [#allocation3], 1
    %2248 = vsyncpa [#allocation4], 1
    %2249 = vsyncpa [#allocation6], 1

</llo_original>
